<compile_context>
chip_gen: v7x
topology: tpu7x:2x2x1
jax: 0.10.0
libtpu: 0.0.40
codegen_flags: <defaults>
</compile_context>

<pallas_src>
import jax
import jax.numpy as jnp
from jax.experimental import pallas as pl
from jax.experimental.pallas import tpu as pltpu


def _round_up(x, m):
    return (x + m - 1) // m * m


# ----------------------------------------------------------------------------
# Pallas kernels
# ----------------------------------------------------------------------------
def _conv_pool_gemm_kernel(x_ref, w_ref, b_ref, o_ref):
    """Fused conv-as-GEMM + bias + 2x2 max-pool + ReLU.

    x_ref: (4, TM, K) bf16 -- im2col patches for the 4 pool-window offsets
    w_ref: (K, 128)   bf16
    b_ref: (1, 128)   f32
    o_ref: (TM, 128)  bf16
    """
    w = w_ref[...]
    acc = jnp.dot(x_ref[0], w, preferred_element_type=jnp.float32)
    for i in range(1, 4):                      # max over the 2x2 pool window
        acc = jnp.maximum(acc, jnp.dot(x_ref[i], w,
                                       preferred_element_type=jnp.float32))
    acc = jnp.maximum(acc + b_ref[...], 0.0)   # bias + ReLU (f32 epilogue)
    o_ref[...] = acc.astype(o_ref.dtype)


def conv_pool_gemm(p, w, b, *, tm=256, out_dtype=jnp.bfloat16):
    """p: (4, M, K) bf16, w: (K, 128) bf16, b: (128,) f32 -> (M, 128)."""
    _, M, K = p.shape
    N = w.shape[1]
    TM = min(tm, _round_up(M, 8))
    Mp = _round_up(M, TM)
    if Mp != M:
        p = jnp.pad(p, ((0, 0), (0, Mp - M), (0, 0)))
    out = pl.pallas_call(
        _conv_pool_gemm_kernel,
        out_shape=jax.ShapeDtypeStruct((Mp, N), out_dtype),
        grid=(Mp // TM,),
        in_specs=[
            pl.BlockSpec((4, TM, K), lambda m: (0, m, 0)),
            pl.BlockSpec((K, N), lambda m: (0, 0)),
            pl.BlockSpec((1, N), lambda m: (0, 0)),
        ],
        out_specs=pl.BlockSpec((TM, N), lambda m: (m, 0)),
        compiler_params=pltpu.CompilerParams(
            dimension_semantics=("parallel",)),
    )(p, w, b.reshape(1, N))
    return out[:M]


def _fc_fused_kernel(x_ref, w1_ref, b1_ref, w2_ref, b2_ref, o_ref):
    """relu(relu(x @ w1 + b1) @ w2 + b2); hidden stays in VMEM/vregs."""
    h = jnp.dot(x_ref[...], w1_ref[...], preferred_element_type=jnp.float32)
    h = jnp.maximum(h + b1_ref[...], 0.0)
    y = jnp.dot(h.astype(jnp.bfloat16), w2_ref[...],
                preferred_element_type=jnp.float32)
    o_ref[...] = jnp.maximum(y + b2_ref[...], 0.0)


def fc_fused(x, w1, b1, w2, b2, *, tm=256):
    """x: (M, K) bf16, w1: (K, 128) bf16, w2: (128, 128) bf16 -> (M, 128) f32."""
    M, K = x.shape
    H = w1.shape[1]
    N = w2.shape[1]
    TM = min(tm, _round_up(M, 8))
    Mp = _round_up(M, TM)
    if Mp != M:
        x = jnp.pad(x, ((0, Mp - M), (0, 0)))
    out = pl.pallas_call(
        _fc_fused_kernel,
        out_shape=jax.ShapeDtypeStruct((Mp, N), jnp.float32),
        grid=(Mp // TM,),
        in_specs=[
            pl.BlockSpec((TM, K), lambda m: (m, 0)),
            pl.BlockSpec((K, H), lambda m: (0, 0)),
            pl.BlockSpec((1, H), lambda m: (0, 0)),
            pl.BlockSpec((H, N), lambda m: (0, 0)),
            pl.BlockSpec((1, N), lambda m: (0, 0)),
        ],
        out_specs=pl.BlockSpec((TM, N), lambda m: (m, 0)),
        compiler_params=pltpu.CompilerParams(
            dimension_semantics=("parallel",)),
    )(x, w1, b1.reshape(1, H), w2, b2.reshape(1, N))
    return out[:M]


# ----------------------------------------------------------------------------
# Glue (plain JAX): parameter packing, im2col with pool folding
# ----------------------------------------------------------------------------
def init_params(key):
    """Deterministic PyTorch-default-style uniform init (synthetic weights)."""
    ks = jax.random.split(key, 8)

    def u(k, shape, fan_in):
        bound = 1.0 / jnp.sqrt(jnp.float32(fan_in))
        return jax.random.uniform(k, shape, jnp.float32, -bound, bound)

    return {
        "w1": u(ks[0], (32, 1, 5, 5), 1 * 5 * 5),
        "b1": u(ks[1], (32,), 1 * 5 * 5),
        "w2": u(ks[2], (49, 32, 2, 2), 32 * 2 * 2),
        "b2": u(ks[3], (49,), 32 * 2 * 2),
        "wf1": u(ks[4], (100, 196), 196),
        "bf1": u(ks[5], (100,), 196),
        "wf2": u(ks[6], (10, 100), 100),
        "bf2": u(ks[7], (10,), 100),
    }


def pack_params(params):
    """One-time repack: pad lane dims to 128, pad contraction dims, fold the
    NCHW .view(-1,196) flatten into fc1's columns, cast GEMM operands to bf16.
    All padding is zero, so padded activation channels stay exactly 0."""
    bf16 = jnp.bfloat16

    # conv1: (32,1,5,5) -> (K=25->32, N=32->128); K order = (dh, dw)
    w1 = params["w1"].reshape(32, 25).T
    w1 = jnp.pad(w1, ((0, 7), (0, 96))).astype(bf16)
    b1 = jnp.pad(params["b1"], (0, 96)).astype(jnp.float32)

    # conv2: (49,32,2,2) -> (K=4*128, N=49->128); K order = ((dh,dw), c_padded)
    w2 = jnp.transpose(params["w2"], (2, 3, 1, 0))          # (dh, dw, cin, cout)
    w2 = jnp.pad(w2, ((0, 0), (0, 0), (0, 96), (0, 79)))
    w2 = w2.reshape(4 * 128, 128).astype(bf16)
    b2 = jnp.pad(params["b2"], (0, 79)).astype(jnp.float32)

    # fc1: torch flat order is c*4 + (h*2+w); permute columns so it consumes
    # our (pool-position, padded-channel) activation order directly.
    wf1 = params["wf1"].reshape(100, 49, 4)                 # (j, c, p)
    wf1 = jnp.transpose(wf1, (2, 1, 0))                     # (p, c, j)
    wf1 = jnp.pad(wf1, ((0, 0), (0, 79), (0, 28)))
    wf1 = wf1.reshape(4 * 128, 128).astype(bf16)
    bf1 = jnp.pad(params["bf1"], (0, 28)).astype(jnp.float32)

    # fc2: (10,100) -> (K=100->128, N=10->128)
    wf2 = jnp.pad(params["wf2"].T, ((0, 28), (0, 118))).astype(bf16)
    bf2 = jnp.pad(params["bf2"], (0, 118)).astype(jnp.float32)

    return {"w1": w1, "b1": b1, "w2": w2, "b2": b2,
            "wf1": wf1, "bf1": bf1, "wf2": wf2, "bf2": bf2}


def classify_net_forward(pp, x):
    """x: (N, 2, 14, 14) NCHW f32 -> (out (2N,10) f32, reshaped_out (N,20) f32)."""
    N = x.shape[0]
    B = 2 * N
    bf16 = jnp.bfloat16

    # Fold the 2 input channels into the batch dim: row index = ii*N + n,
    # matching out[N*ii:N*(ii+1), :] = result(channel ii) in the reference.
    xb = jnp.transpose(x, (1, 0, 2, 3)).reshape(B, 14, 14)

    # ---- stage 1: conv1(5x5, 1->32) + maxpool2 + relu ------------------------
    # im2col patches for all 10x10 conv output positions, K order (dh, dw).
    p1 = jnp.stack([xb[:, dh:dh + 10, dw:dw + 10]
                    for dh in range(5) for dw in range(5)], axis=-1)   # (B,10,10,25)
    # Split positions into the 4 pool-window offsets (oh, ow); rows = (b,ho,wo).
    p1 = p1.reshape(B, 5, 2, 5, 2, 25).transpose(2, 4, 0, 1, 3, 5)
    p1 = p1.reshape(4, B * 25, 25)
    p1 = jnp.pad(p1, ((0, 0), (0, 0), (0, 7))).astype(bf16)            # K 25->32
    # TODO(synk): BatchNorm2d branch (batch_normalization=True) not implemented.
    a1 = conv_pool_gemm(p1, pp["w1"], pp["b1"])                        # (B*25, 128)
    a1 = a1.reshape(B, 5, 5, 128)          # padded channels are exactly 0

    # ---- stage 2: conv2(2x2, 32->49) + maxpool2 + relu -----------------------
    p2 = jnp.concatenate([a1[:, dh:dh + 4, dw:dw + 4, :]
                          for dh in range(2) for dw in range(2)],
                         axis=-1)                                      # (B,4,4,512)
    p2 = p2.reshape(B, 2, 2, 2, 2, 512).transpose(2, 4, 0, 1, 3, 5)
    p2 = p2.reshape(4, B * 4, 512)
    a2 = conv_pool_gemm(p2, pp["w2"], pp["b2"])                        # (B*4, 128)

    # ---- stage 3: relu(fc1) -> relu(fc2), fused ------------------------------
    # Per-image flatten is a contiguous reshape; the NCHW .view(-1,196)
    # permutation is already folded into pp["wf1"]'s columns.
    flat = a2.reshape(B, 4 * 128)
    # TODO(synk): Dropout branch (dropout=True) not implemented (default path).
    y = fc_fused(flat, pp["wf1"], pp["bf1"], pp["wf2"], pp["bf2"])     # (B,128) f32

    out = y[:, :10]                                                    # (2N, 10)
    reshaped_out = jnp.concatenate([out[:N], out[N:]], axis=1)         # (N, 20)
    return out, reshaped_out


if __name__ == "__main__":
    key = jax.random.PRNGKey(0)
    pkey, xkey = jax.random.split(key)
    params = init_params(pkey)
    packed = pack_params(params)

    # Small, module-consistent shapes: batch N=2, 2 channels, 14x14 spatial.
    x = jax.random.normal(xkey, (2, 2, 14, 14), jnp.float32)

    fwd = jax.jit(classify_net_forward)
    out, reshaped_out = fwd(packed, x)
    jax.block_until_ready((out, reshaped_out))

    assert out.shape == (4, 10) and out.dtype == jnp.float32
    assert reshaped_out.shape == (2, 20) and reshaped_out.dtype == jnp.float32
    print("KERNEL_OK")
</pallas_src>

<mosaic_0001>
module attributes {stable_mosaic.version = 11 : i64} {
  func.func @_conv_pool_gemm_kernel(%arg0: i32, %arg1: memref<4x104x32xbf16, #tpu.memory_space<vmem>>, %arg2: memref<32x128xbf16, #tpu.memory_space<vmem>>, %arg3: memref<1x128xf32, #tpu.memory_space<vmem>>, %arg4: memref<104x128xbf16, #tpu.memory_space<vmem>>) attributes {dimension_semantics = [#tpu.dimension_semantics<parallel>], iteration_bounds = array<i64: 1>, scalar_prefetch = 0 : i64, scratch_operands = 0 : i64, tpu.core_type = #tpu.core_type<tc>, window_params = [{transform_indices = @transform_0, window_bounds = array<i64: 4, 104, 32>}, {pipeline_mode = #tpu.pipeline_mode<synchronous>, transform_indices = @transform_1, window_bounds = array<i64: 32, 128>}, {pipeline_mode = #tpu.pipeline_mode<synchronous>, transform_indices = @transform_2, window_bounds = array<i64: 1, 128>}, {transform_indices = @transform_3, window_bounds = array<i64: 104, 128>}]} {
    %c0 = arith.constant 0 : index
    %c0_0 = arith.constant 0 : index
    %0 = vector.load %arg2[%c0, %c0_0] : memref<32x128xbf16, #tpu.memory_space<vmem>>, vector<32x128xbf16>
    %c0_1 = arith.constant 0 : index
    %c0_2 = arith.constant 0 : index
    %c0_3 = arith.constant 0 : index
    %1 = vector.load %arg1[%c0_1, %c0_2, %c0_3] : memref<4x104x32xbf16, #tpu.memory_space<vmem>>, vector<1x104x32xbf16>
    %2 = vector.shape_cast %1 : vector<1x104x32xbf16> to vector<104x32xbf16>
    %cst = arith.constant dense<0.000000e+00> : vector<104x128xf32>
    %3 = tpu.matmul %2, %0, %cst {dimension_numbers = #tpu.dot_dimension_numbers<[1], [0], [0], [1], [0, 0, 1, 1], [], []>} : vector<104x32xbf16>, vector<32x128xbf16>, vector<104x128xf32> -> vector<104x128xf32>
    %c1 = arith.constant 1 : index
    %c0_4 = arith.constant 0 : index
    %c0_5 = arith.constant 0 : index
    %4 = vector.load %arg1[%c1, %c0_4, %c0_5] : memref<4x104x32xbf16, #tpu.memory_space<vmem>>, vector<1x104x32xbf16>
    %5 = vector.shape_cast %4 : vector<1x104x32xbf16> to vector<104x32xbf16>
    %cst_6 = arith.constant dense<0.000000e+00> : vector<104x128xf32>
    %6 = tpu.matmul %5, %0, %cst_6 {dimension_numbers = #tpu.dot_dimension_numbers<[1], [0], [0], [1], [0, 0, 1, 1], [], []>} : vector<104x32xbf16>, vector<32x128xbf16>, vector<104x128xf32> -> vector<104x128xf32>
    %7 = arith.maximumf %3, %6 : vector<104x128xf32>
    %c2 = arith.constant 2 : index
    %c0_7 = arith.constant 0 : index
    %c0_8 = arith.constant 0 : index
    %8 = vector.load %arg1[%c2, %c0_7, %c0_8] : memref<4x104x32xbf16, #tpu.memory_space<vmem>>, vector<1x104x32xbf16>
    %9 = vector.shape_cast %8 : vector<1x104x32xbf16> to vector<104x32xbf16>
    %cst_9 = arith.constant dense<0.000000e+00> : vector<104x128xf32>
    %10 = tpu.matmul %9, %0, %cst_9 {dimension_numbers = #tpu.dot_dimension_numbers<[1], [0], [0], [1], [0, 0, 1, 1], [], []>} : vector<104x32xbf16>, vector<32x128xbf16>, vector<104x128xf32> -> vector<104x128xf32>
    %11 = arith.maximumf %7, %10 : vector<104x128xf32>
    %c3 = arith.constant 3 : index
    %c0_10 = arith.constant 0 : index
    %c0_11 = arith.constant 0 : index
    %12 = vector.load %arg1[%c3, %c0_10, %c0_11] : memref<4x104x32xbf16, #tpu.memory_space<vmem>>, vector<1x104x32xbf16>
    %13 = vector.shape_cast %12 : vector<1x104x32xbf16> to vector<104x32xbf16>
    %cst_12 = arith.constant dense<0.000000e+00> : vector<104x128xf32>
    %14 = tpu.matmul %13, %0, %cst_12 {dimension_numbers = #tpu.dot_dimension_numbers<[1], [0], [0], [1], [0, 0, 1, 1], [], []>} : vector<104x32xbf16>, vector<32x128xbf16>, vector<104x128xf32> -> vector<104x128xf32>
    %15 = arith.maximumf %11, %14 : vector<104x128xf32>
    %c0_13 = arith.constant 0 : index
    %c0_14 = arith.constant 0 : index
    %16 = vector.load %arg3[%c0_13, %c0_14] : memref<1x128xf32, #tpu.memory_space<vmem>>, vector<1x128xf32>
    %17 = vector.broadcast %16 : vector<1x128xf32> to vector<104x128xf32>
    %18 = arith.addf %15, %17 : vector<104x128xf32>
    %cst_15 = arith.constant 0.000000e+00 : f32
    %19 = vector.broadcast %cst_15 : f32 to vector<104x128xf32>
    %20 = arith.maximumf %18, %19 : vector<104x128xf32>
    %21 = arith.truncf %20 : vector<104x128xf32> to vector<104x128xbf16>
    %c0_16 = arith.constant 0 : index
    %c0_17 = arith.constant 0 : index
    %22 = vector.load %arg4[%c0_16, %c0_17] : memref<104x128xbf16, #tpu.memory_space<vmem>>, vector<104x128xbf16>
    tpu.vector_store %arg4[%c0_16, %c0_17], %21 {strides = array<i32>} : memref<104x128xbf16, #tpu.memory_space<vmem>>, vector<104x128xbf16>,
    return
  }
  func.func @transform_0(%arg0: i32) -> (i32, i32, i32) {
    %c0_i32 = arith.constant 0 : i32
    %c0_i32_0 = arith.constant 0 : i32
    %c0_i32_1 = arith.constant 0 : i32
    return %c0_i32, %arg0, %c0_i32_0 : i32, i32, i32
  }
  func.func @transform_1(%arg0: i32) -> (i32, i32) {
    %c0_i32 = arith.constant 0 : i32
    %c0_i32_0 = arith.constant 0 : i32
    %c0_i32_1 = arith.constant 0 : i32
    return %c0_i32, %c0_i32_0 : i32, i32
  }
  func.func @transform_2(%arg0: i32) -> (i32, i32) {
    %c0_i32 = arith.constant 0 : i32
    %c0_i32_0 = arith.constant 0 : i32
    %c0_i32_1 = arith.constant 0 : i32
    return %c0_i32, %c0_i32_0 : i32, i32
  }
  func.func @transform_3(%arg0: i32) -> (i32, i32) {
    %c0_i32 = arith.constant 0 : i32
    %c0_i32_0 = arith.constant 0 : i32
    return %arg0, %c0_i32 : i32, i32
  }
}

module attributes {stable_mosaic.version = 11 : i64} {
  func.func @_conv_pool_gemm_kernel(%arg0: i32, %arg1: memref<4x16x512xbf16, #tpu.memory_space<vmem>>, %arg2: memref<512x128xbf16, #tpu.memory_space<vmem>>, %arg3: memref<1x128xf32, #tpu.memory_space<vmem>>, %arg4: memref<16x128xbf16, #tpu.memory_space<vmem>>) attributes {dimension_semantics = [#tpu.dimension_semantics<parallel>], iteration_bounds = array<i64: 1>, scalar_prefetch = 0 : i64, scratch_operands = 0 : i64, tpu.core_type = #tpu.core_type<tc>, window_params = [{transform_indices = @transform_0, window_bounds = array<i64: 4, 16, 512>}, {pipeline_mode = #tpu.pipeline_mode<synchronous>, transform_indices = @transform_1, window_bounds = array<i64: 512, 128>}, {pipeline_mode = #tpu.pipeline_mode<synchronous>, transform_indices = @transform_2, window_bounds = array<i64: 1, 128>}, {transform_indices = @transform_3, window_bounds = array<i64: 16, 128>}]} {
    %c0 = arith.constant 0 : index
    %c0_0 = arith.constant 0 : index
    %0 = vector.load %arg2[%c0, %c0_0] : memref<512x128xbf16, #tpu.memory_space<vmem>>, vector<512x128xbf16>
    %c0_1 = arith.constant 0 : index
    %c0_2 = arith.constant 0 : index
    %c0_3 = arith.constant 0 : index
    %1 = vector.load %arg1[%c0_1, %c0_2, %c0_3] : memref<4x16x512xbf16, #tpu.memory_space<vmem>>, vector<1x16x512xbf16>
    %2 = vector.shape_cast %1 : vector<1x16x512xbf16> to vector<16x512xbf16>
    %cst = arith.constant dense<0.000000e+00> : vector<16x128xf32>
    %3 = tpu.matmul %2, %0, %cst {dimension_numbers = #tpu.dot_dimension_numbers<[1], [0], [0], [1], [0, 0, 1, 1], [], []>} : vector<16x512xbf16>, vector<512x128xbf16>, vector<16x128xf32> -> vector<16x128xf32>
    %c1 = arith.constant 1 : index
    %c0_4 = arith.constant 0 : index
    %c0_5 = arith.constant 0 : index
    %4 = vector.load %arg1[%c1, %c0_4, %c0_5] : memref<4x16x512xbf16, #tpu.memory_space<vmem>>, vector<1x16x512xbf16>
    %5 = vector.shape_cast %4 : vector<1x16x512xbf16> to vector<16x512xbf16>
    %cst_6 = arith.constant dense<0.000000e+00> : vector<16x128xf32>
    %6 = tpu.matmul %5, %0, %cst_6 {dimension_numbers = #tpu.dot_dimension_numbers<[1], [0], [0], [1], [0, 0, 1, 1], [], []>} : vector<16x512xbf16>, vector<512x128xbf16>, vector<16x128xf32> -> vector<16x128xf32>
    %7 = arith.maximumf %3, %6 : vector<16x128xf32>
    %c2 = arith.constant 2 : index
    %c0_7 = arith.constant 0 : index
    %c0_8 = arith.constant 0 : index
    %8 = vector.load %arg1[%c2, %c0_7, %c0_8] : memref<4x16x512xbf16, #tpu.memory_space<vmem>>, vector<1x16x512xbf16>
    %9 = vector.shape_cast %8 : vector<1x16x512xbf16> to vector<16x512xbf16>
    %cst_9 = arith.constant dense<0.000000e+00> : vector<16x128xf32>
    %10 = tpu.matmul %9, %0, %cst_9 {dimension_numbers = #tpu.dot_dimension_numbers<[1], [0], [0], [1], [0, 0, 1, 1], [], []>} : vector<16x512xbf16>, vector<512x128xbf16>, vector<16x128xf32> -> vector<16x128xf32>
    %11 = arith.maximumf %7, %10 : vector<16x128xf32>
    %c3 = arith.constant 3 : index
    %c0_10 = arith.constant 0 : index
    %c0_11 = arith.constant 0 : index
    %12 = vector.load %arg1[%c3, %c0_10, %c0_11] : memref<4x16x512xbf16, #tpu.memory_space<vmem>>, vector<1x16x512xbf16>
    %13 = vector.shape_cast %12 : vector<1x16x512xbf16> to vector<16x512xbf16>
    %cst_12 = arith.constant dense<0.000000e+00> : vector<16x128xf32>
    %14 = tpu.matmul %13, %0, %cst_12 {dimension_numbers = #tpu.dot_dimension_numbers<[1], [0], [0], [1], [0, 0, 1, 1], [], []>} : vector<16x512xbf16>, vector<512x128xbf16>, vector<16x128xf32> -> vector<16x128xf32>
    %15 = arith.maximumf %11, %14 : vector<16x128xf32>
    %c0_13 = arith.constant 0 : index
    %c0_14 = arith.constant 0 : index
    %16 = vector.load %arg3[%c0_13, %c0_14] : memref<1x128xf32, #tpu.memory_space<vmem>>, vector<1x128xf32>
    %17 = vector.broadcast %16 : vector<1x128xf32> to vector<16x128xf32>
    %18 = arith.addf %15, %17 : vector<16x128xf32>
    %cst_15 = arith.constant 0.000000e+00 : f32
    %19 = vector.broadcast %cst_15 : f32 to vector<16x128xf32>
    %20 = arith.maximumf %18, %19 : vector<16x128xf32>
    %21 = arith.truncf %20 : vector<16x128xf32> to vector<16x128xbf16>
    %c0_16 = arith.constant 0 : index
    %c0_17 = arith.constant 0 : index
    %22 = vector.load %arg4[%c0_16, %c0_17] : memref<16x128xbf16, #tpu.memory_space<vmem>>, vector<16x128xbf16>
    tpu.vector_store %arg4[%c0_16, %c0_17], %21 {strides = array<i32>} : memref<16x128xbf16, #tpu.memory_space<vmem>>, vector<16x128xbf16>,
    return
  }
  func.func @transform_0(%arg0: i32) -> (i32, i32, i32) {
    %c0_i32 = arith.constant 0 : i32
    %c0_i32_0 = arith.constant 0 : i32
    %c0_i32_1 = arith.constant 0 : i32
    return %c0_i32, %arg0, %c0_i32_0 : i32, i32, i32
  }
  func.func @transform_1(%arg0: i32) -> (i32, i32) {
    %c0_i32 = arith.constant 0 : i32
    %c0_i32_0 = arith.constant 0 : i32
    %c0_i32_1 = arith.constant 0 : i32
    return %c0_i32, %c0_i32_0 : i32, i32
  }
  func.func @transform_2(%arg0: i32) -> (i32, i32) {
    %c0_i32 = arith.constant 0 : i32
    %c0_i32_0 = arith.constant 0 : i32
    %c0_i32_1 = arith.constant 0 : i32
    return %c0_i32, %c0_i32_0 : i32, i32
  }
  func.func @transform_3(%arg0: i32) -> (i32, i32) {
    %c0_i32 = arith.constant 0 : i32
    %c0_i32_0 = arith.constant 0 : i32
    return %arg0, %c0_i32 : i32, i32
  }
}

module attributes {stable_mosaic.version = 11 : i64} {
  func.func @_fc_fused_kernel(%arg0: i32, %arg1: memref<8x512xbf16, #tpu.memory_space<vmem>>, %arg2: memref<512x128xbf16, #tpu.memory_space<vmem>>, %arg3: memref<1x128xf32, #tpu.memory_space<vmem>>, %arg4: memref<128x128xbf16, #tpu.memory_space<vmem>>, %arg5: memref<1x128xf32, #tpu.memory_space<vmem>>, %arg6: memref<8x128xf32, #tpu.memory_space<vmem>>) attributes {dimension_semantics = [#tpu.dimension_semantics<parallel>], iteration_bounds = array<i64: 1>, scalar_prefetch = 0 : i64, scratch_operands = 0 : i64, tpu.core_type = #tpu.core_type<tc>, window_params = [{transform_indices = @transform_0, window_bounds = array<i64: 8, 512>}, {pipeline_mode = #tpu.pipeline_mode<synchronous>, transform_indices = @transform_1, window_bounds = array<i64: 512, 128>}, {pipeline_mode = #tpu.pipeline_mode<synchronous>, transform_indices = @transform_2, window_bounds = array<i64: 1, 128>}, {pipeline_mode = #tpu.pipeline_mode<synchronous>, transform_indices = @transform_3, window_bounds = array<i64: 128, 128>}, {pipeline_mode = #tpu.pipeline_mode<synchronous>, transform_indices = @transform_4, window_bounds = array<i64: 1, 128>}, {transform_indices = @transform_5, window_bounds = array<i64: 8, 128>}]} {
    %c0 = arith.constant 0 : index
    %c0_0 = arith.constant 0 : index
    %0 = vector.load %arg1[%c0, %c0_0] : memref<8x512xbf16, #tpu.memory_space<vmem>>, vector<8x512xbf16>
    %c0_1 = arith.constant 0 : index
    %c0_2 = arith.constant 0 : index
    %1 = vector.load %arg2[%c0_1, %c0_2] : memref<512x128xbf16, #tpu.memory_space<vmem>>, vector<512x128xbf16>
    %cst = arith.constant dense<0.000000e+00> : vector<8x128xf32>
    %2 = tpu.matmul %0, %1, %cst {dimension_numbers = #tpu.dot_dimension_numbers<[1], [0], [0], [1], [0, 0, 1, 1], [], []>} : vector<8x512xbf16>, vector<512x128xbf16>, vector<8x128xf32> -> vector<8x128xf32>
    %c0_3 = arith.constant 0 : index
    %c0_4 = arith.constant 0 : index
    %3 = vector.load %arg3[%c0_3, %c0_4] : memref<1x128xf32, #tpu.memory_space<vmem>>, vector<1x128xf32>
    %4 = vector.broadcast %3 : vector<1x128xf32> to vector<8x128xf32>
    %5 = arith.addf %2, %4 : vector<8x128xf32>
    %cst_5 = arith.constant 0.000000e+00 : f32
    %6 = vector.broadcast %cst_5 : f32 to vector<8x128xf32>
    %7 = arith.maximumf %5, %6 : vector<8x128xf32>
    %8 = arith.truncf %7 : vector<8x128xf32> to vector<8x128xbf16>
    %c0_6 = arith.constant 0 : index
    %c0_7 = arith.constant 0 : index
    %9 = vector.load %arg4[%c0_6, %c0_7] : memref<128x128xbf16, #tpu.memory_space<vmem>>, vector<128x128xbf16>
    %cst_8 = arith.constant dense<0.000000e+00> : vector<8x128xf32>
    %10 = tpu.matmul %8, %9, %cst_8 {dimension_numbers = #tpu.dot_dimension_numbers<[1], [0], [0], [1], [0, 0, 1, 1], [], []>} : vector<8x128xbf16>, vector<128x128xbf16>, vector<8x128xf32> -> vector<8x128xf32>
    %c0_9 = arith.constant 0 : index
    %c0_10 = arith.constant 0 : index
    %11 = vector.load %arg5[%c0_9, %c0_10] : memref<1x128xf32, #tpu.memory_space<vmem>>, vector<1x128xf32>
    %12 = vector.broadcast %11 : vector<1x128xf32> to vector<8x128xf32>
    %13 = arith.addf %10, %12 : vector<8x128xf32>
    %cst_11 = arith.constant 0.000000e+00 : f32
    %14 = vector.broadcast %cst_11 : f32 to vector<8x128xf32>
    %15 = arith.maximumf %13, %14 : vector<8x128xf32>
    %c0_12 = arith.constant 0 : index
    %c0_13 = arith.constant 0 : index
    %16 = vector.load %arg6[%c0_12, %c0_13] : memref<8x128xf32, #tpu.memory_space<vmem>>, vector<8x128xf32>
    tpu.vector_store %arg6[%c0_12, %c0_13], %15 {strides = array<i32>} : memref<8x128xf32, #tpu.memory_space<vmem>>, vector<8x128xf32>,
    return
  }
  func.func @transform_0(%arg0: i32) -> (i32, i32) {
    %c0_i32 = arith.constant 0 : i32
    %c0_i32_0 = arith.constant 0 : i32
    return %arg0, %c0_i32 : i32, i32
  }
  func.func @transform_1(%arg0: i32) -> (i32, i32) {
    %c0_i32 = arith.constant 0 : i32
    %c0_i32_0 = arith.constant 0 : i32
    %c0_i32_1 = arith.constant 0 : i32
    return %c0_i32, %c0_i32_0 : i32, i32
  }
  func.func @transform_2(%arg0: i32) -> (i32, i32) {
    %c0_i32 = arith.constant 0 : i32
    %c0_i32_0 = arith.constant 0 : i32
    %c0_i32_1 = arith.constant 0 : i32
    return %c0_i32, %c0_i32_0 : i32, i32
  }
  func.func @transform_3(%arg0: i32) -> (i32, i32) {
    %c0_i32 = arith.constant 0 : i32
    %c0_i32_0 = arith.constant 0 : i32
    %c0_i32_1 = arith.constant 0 : i32
    return %c0_i32, %c0_i32_0 : i32, i32
  }
  func.func @transform_4(%arg0: i32) -> (i32, i32) {
    %c0_i32 = arith.constant 0 : i32
    %c0_i32_0 = arith.constant 0 : i32
    %c0_i32_1 = arith.constant 0 : i32
    return %c0_i32, %c0_i32_0 : i32, i32
  }
  func.func @transform_5(%arg0: i32) -> (i32, i32) {
    %c0_i32 = arith.constant 0 : i32
    %c0_i32_0 = arith.constant 0 : i32
    return %arg0, %c0_i32 : i32, i32
  }
}

</mosaic_0001>

<llo_original>
// kernel: classify_net_forward.3
$region0: #{classify_net_forward.3}
  #allocation0 [shape = 'u32[]', space=smem, size = 0x4, offset = 0x4, fixed_abs, tag = 'smem constant byte address 0x4 - core index']
  #allocation1 [shape = 'u32[144,128]{1,0:T(1,128)}', space=vmem, size = 0x12000, scoped, tag = 'internal scratch']
  %s0 = inlined_call_operand.vmem [shape: bf16[4,104,32], index: 0, kind: input, shape index: {}]
  %s1 = inlined_call_operand.vmem [shape: bf16[32,128], index: 1, kind: input, shape index: {}]
  %s2 = inlined_call_operand.vmem [shape: f32[1,128], index: 2, kind: input, shape index: {}]
  %s3 = inlined_call_operand.vmem [shape: bf16[104,128], index: 3, kind: output, shape index: {}]
  %s4 = sld [smem:[#allocation0]]
  $region22: #{classify_net_forward.3} parent=0
    _
  %s6 = ssub.s32 1, %s4
  %s7 = scalar_select 0, %s6, %s4
  // Predicated region
  $region2: #{classify_net_forward.3} parent=0 // pred_check
    _
  $region3: #{classify_net_forward.3} parent=0 // pred_check_branch
    %9 = sbr.rel (0) target = $region5
  $region4: #{classify_net_forward.3} parent=0 // pred_region
    _
  $region5: #{classify_net_forward.3} parent=0 // pred_fallthru
    _
  // Predicated region
  $region6: #{classify_net_forward.3} parent=0 // pred_check
    _
  $region7: #{classify_net_forward.3} parent=0 // pred_check_branch
    %11 = sbr.rel (0) target = $region9
  $region8: #{classify_net_forward.3} parent=0 // pred_region
    _
  $region9: #{classify_net_forward.3} parent=0 // pred_fallthru
    _
  // Predicated region
  $region10: #{classify_net_forward.3} parent=0 // pred_check
    _
  $region11: #{classify_net_forward.3} parent=0 // pred_check_branch
    %13 = sbr.rel (0) target = $region13
  $region12: #{classify_net_forward.3} parent=0 // pred_region
    _
  $region13: #{classify_net_forward.3} parent=0 // pred_fallthru
    _
  %v15 = vld [vmem:[%s1] sm:$0xf]
  %v16 = vld [vmem:[%s1 + $0x4] sm:$0xf]
  %v17 = vld [vmem:[%s1 + $0x8] sm:$0xf]
  %v18 = vld [vmem:[%s1 + $0xc] sm:$0xf]
  %v19 = vld [vmem:[%s0] sm:$0xf]
  %v20 = vld [vmem:[%s0 + $0x4] sm:$0xf]
  %v21 = vld [vmem:[%s0 + $0x8] sm:$0xf]
  %v22 = vld [vmem:[%s0 + $0xc] sm:$0xf]
  %v23 = vld [vmem:[%s0 + $0x10] sm:$0xf]
  %v24 = vld [vmem:[%s0 + $0x14] sm:$0xf]
  %v25 = vld [vmem:[%s0 + $0x18] sm:$0xf]
  %v26 = vld [vmem:[%s0 + $0x1c] sm:$0xf]
  %v27 = vld [vmem:[%s0 + $0x20] sm:$0xf]
  %v28 = vld [vmem:[%s0 + $0x24] sm:$0xf]
  %v29 = vld [vmem:[%s0 + $0x28] sm:$0xf]
  %v30 = vld [vmem:[%s0 + $0x2c] sm:$0xf]
  %v31 = vld [vmem:[%s0 + $0x30] sm:$0xf]
  %v45 = vunpack.c.l.b16 %v19
  %v46 = vunpack.c.l.b16 %v20
  %v47 = vunpack.c.l.b16 %v21
  %v48 = vunpack.c.l.b16 %v22
  %v49 = vunpack.c.l.b16 %v23
  %v50 = vunpack.c.l.b16 %v24
  %v51 = vunpack.c.l.b16 %v25
  %v52 = vunpack.c.l.b16 %v26
  %v53 = vunpack.c.l.b16 %v27
  %v54 = vunpack.c.l.b16 %v28
  %v55 = vunpack.c.l.b16 %v29
  %v56 = vunpack.c.l.b16 %v30
  %v57 = vunpack.c.l.b16 %v31
  %v58 = vpack.c.b16 %v46, %v45
  %v59 = vpack.c.b16 %v48, %v47
  %v60 = vpack.c.b16 %v50, %v49
  %v61 = vpack.c.b16 %v52, %v51
  %v62 = vpack.c.b16 %v54, %v53
  %v63 = vpack.c.b16 %v56, %v55
  %v64 = vpack.c.b16 %v57, %v57
  %v69 = vunpack.c.l.b16 %v15
  %v70 = vunpack.c.l.b16 %v16
  %v71 = vunpack.c.l.b16 %v17
  %v72 = vunpack.c.l.b16 %v18
  %v73 = vpack.c.b16 %v70, %v69
  %v74 = vpack.c.b16 %v72, %v71
  %vm77 = vcmask 261120
  %v79 = vsel %vm77, %v58, 0
  %v82 = vsel %vm77, %v59, 0
  %v85 = vsel %vm77, %v60, 0
  %v88 = vsel %vm77, %v61, 0
  %v91 = vsel %vm77, %v62, 0
  %v94 = vsel %vm77, %v63, 0
  %v97 = vsel %vm77, %v64, 0
  %99 = vmatprep.subr.bf16.mxu0 0
  %100 = vmatpush1.bf16.msra.mxu0 %v73
  %101 = vmatprep.subr.bf16.mxu0 0
  %102 = vmatpush1.bf16.msra.mxu0 %v74
  %103 = vmatprep.subr.bf16.mxu0 0
  %104 = vmatpush1.bf16.msra.mxu0 0
  %105 = vmatprep.subr.bf16.mxu0 0
  %106 = vmatpush1.bf16.msra.mxu0 0
  %107 = vmatprep.subr.bf16.mxu0 0
  %108 = vmatpush1.bf16.msra.mxu0 0
  %109 = vmatprep.subr.bf16.mxu0 0
  %110 = vmatpush1.bf16.msra.mxu0 0
  %111 = vmatprep.subr.bf16.mxu0 0
  %112 = vmatpush1.bf16.msra.mxu0 0
  %113 = vmatprep.subr.bf16.mxu0 0
  %114 = vmatpush1.bf16.msra.mxu0 0
  %115 = vmatprep.subr.bf16.mxu0 0
  %116 = vmatpush1.bf16.msra.mxu0 0
  %117 = vmatprep.subr.bf16.mxu0 0
  %118 = vmatpush1.bf16.msra.mxu0 0
  %119 = vmatprep.subr.bf16.mxu0 0
  %120 = vmatpush1.bf16.msra.mxu0 0
  %121 = vmatprep.subr.bf16.mxu0 0
  %122 = vmatpush1.bf16.msra.mxu0 0
  %123 = vmatprep.subr.bf16.mxu0 0
  %124 = vmatpush1.bf16.msra.mxu0 0
  %125 = vmatprep.subr.bf16.mxu0 0
  %126 = vmatpush1.bf16.msra.mxu0 0
  %127 = vmatprep.subr.bf16.mxu0 0
  %128 = vmatpush1.bf16.msra.mxu0 0
  %129 = vmatprep.subr.bf16.mxu0 0
  %130 = vmatpush1.bf16.msra.mxu0 0
  %131 = vmatprep.mubr.bf16.mxu0 0
  %132 = vmatmul.mubr.bf16.gmra.mrb[0].mxu0 %v79
  %v133 = vpop.f32.mrb[0].mxu0
  %v134 = vadd.f32 0.0, %v133
  %v135 = vpop.f32.mrb[0].mxu0
  %v136 = vpop.f32.mrb[0].mxu0
  %v137 = vadd.f32 0.0, %v136
  %v138 = vpop.f32.mrb[0].mxu0
  %139 = vmatprep.mubr.bf16.mxu0 0
  %140 = vmatmul.mubr.bf16.gmra.mrb[0].mxu0 %v82
  %v141 = vpop.f32.mrb[0].mxu0
  %v142 = vadd.f32 0.0, %v141
  %v143 = vpop.f32.mrb[0].mxu0
  %v144 = vpop.f32.mrb[0].mxu0
  %v145 = vadd.f32 0.0, %v144
  %v146 = vpop.f32.mrb[0].mxu0
  %147 = vmatprep.mubr.bf16.mxu0 0
  %148 = vmatmul.mubr.bf16.gmra.mrb[0].mxu0 %v85
  %v149 = vpop.f32.mrb[0].mxu0
  %v150 = vadd.f32 0.0, %v149
  %v151 = vpop.f32.mrb[0].mxu0
  %v152 = vpop.f32.mrb[0].mxu0
  %v153 = vadd.f32 0.0, %v152
  %v154 = vpop.f32.mrb[0].mxu0
  %155 = vmatprep.mubr.bf16.mxu0 0
  %156 = vmatmul.mubr.bf16.gmra.mrb[0].mxu0 %v88
  %v157 = vpop.f32.mrb[0].mxu0
  %v158 = vadd.f32 0.0, %v157
  %v159 = vpop.f32.mrb[0].mxu0
  %v160 = vpop.f32.mrb[0].mxu0
  %v161 = vadd.f32 0.0, %v160
  %v162 = vpop.f32.mrb[0].mxu0
  %163 = vmatprep.mubr.bf16.mxu0 0
  %164 = vmatmul.mubr.bf16.gmra.mrb[0].mxu0 %v91
  %v165 = vpop.f32.mrb[0].mxu0
  %v166 = vadd.f32 0.0, %v165
  %v167 = vpop.f32.mrb[0].mxu0
  %v168 = vpop.f32.mrb[0].mxu0
  %v169 = vadd.f32 0.0, %v168
  %v170 = vpop.f32.mrb[0].mxu0
  %171 = vmatprep.mubr.bf16.mxu0 0
  %172 = vmatmul.mubr.bf16.gmra.mrb[0].mxu0 %v94
  %v173 = vpop.f32.mrb[0].mxu0
  %v174 = vadd.f32 0.0, %v173
  %v175 = vpop.f32.mrb[0].mxu0
  %v176 = vpop.f32.mrb[0].mxu0
  %v177 = vadd.f32 0.0, %v176
  %v178 = vpop.f32.mrb[0].mxu0
  %179 = vmatprep.mubr.bf16.mxu0 0
  %180 = vmatmul.mubr.bf16.gmra.mrb[0].mxu0 %v97
  %v181 = vpop.f32.mrb[0].mxu0
  %v182 = vadd.f32 0.0, %v181
  %v183 = vpop.f32.mrb[0].mxu0
  %v184 = vpop.f32.mrb[0].mxu0
  %v185 = vpop.f32.mrb[0].mxu0
  %186 = vdwg.mxu0
  %s187 = scalar_lea.vmem %s0, 52
  %v188 = vld [vmem:[%s187] sm:$0xf]
  %v189 = vld [vmem:[%s187 + $0x4] sm:$0xf]
  %v190 = vld [vmem:[%s187 + $0x8] sm:$0xf]
  %v191 = vld [vmem:[%s187 + $0xc] sm:$0xf]
  %v192 = vld [vmem:[%s187 + $0x10] sm:$0xf]
  %v193 = vld [vmem:[%s187 + $0x14] sm:$0xf]
  %v194 = vld [vmem:[%s187 + $0x18] sm:$0xf]
  %v195 = vld [vmem:[%s187 + $0x1c] sm:$0xf]
  %v196 = vld [vmem:[%s187 + $0x20] sm:$0xf]
  %v197 = vld [vmem:[%s187 + $0x24] sm:$0xf]
  %v198 = vld [vmem:[%s187 + $0x28] sm:$0xf]
  %v199 = vld [vmem:[%s187 + $0x2c] sm:$0xf]
  %v200 = vld [vmem:[%s187 + $0x30] sm:$0xf]
  %v214 = vunpack.c.l.b16 %v188
  %v215 = vunpack.c.l.b16 %v189
  %v216 = vunpack.c.l.b16 %v190
  %v217 = vunpack.c.l.b16 %v191
  %v218 = vunpack.c.l.b16 %v192
  %v219 = vunpack.c.l.b16 %v193
  %v220 = vunpack.c.l.b16 %v194
  %v221 = vunpack.c.l.b16 %v195
  %v222 = vunpack.c.l.b16 %v196
  %v223 = vunpack.c.l.b16 %v197
  %v224 = vunpack.c.l.b16 %v198
  %v225 = vunpack.c.l.b16 %v199
  %v226 = vunpack.c.l.b16 %v200
  %v227 = vpack.c.b16 %v215, %v214
  %v228 = vpack.c.b16 %v217, %v216
  %v229 = vpack.c.b16 %v219, %v218
  %v230 = vpack.c.b16 %v221, %v220
  %v231 = vpack.c.b16 %v223, %v222
  %v232 = vpack.c.b16 %v225, %v224
  %v233 = vpack.c.b16 %v226, %v226
  %v235 = vsel %vm77, %v227, 0
  %v238 = vsel %vm77, %v228, 0
  %v241 = vsel %vm77, %v229, 0
  %v244 = vsel %vm77, %v230, 0
  %v247 = vsel %vm77, %v231, 0
  %v250 = vsel %vm77, %v232, 0
  %v253 = vsel %vm77, %v233, 0
  %255 = vmatprep.subr.bf16.mxu0 0
  %256 = vmatpush1.bf16.msra.mxu0 %v73
  %257 = vmatprep.subr.bf16.mxu0 0
  %258 = vmatpush1.bf16.msra.mxu0 %v74
  %259 = vmatprep.subr.bf16.mxu0 0
  %260 = vmatpush1.bf16.msra.mxu0 0
  %261 = vmatprep.subr.bf16.mxu0 0
  %262 = vmatpush1.bf16.msra.mxu0 0
  %263 = vmatprep.subr.bf16.mxu0 0
  %264 = vmatpush1.bf16.msra.mxu0 0
  %265 = vmatprep.subr.bf16.mxu0 0
  %266 = vmatpush1.bf16.msra.mxu0 0
  %267 = vmatprep.subr.bf16.mxu0 0
  %268 = vmatpush1.bf16.msra.mxu0 0
  %269 = vmatprep.subr.bf16.mxu0 0
  %270 = vmatpush1.bf16.msra.mxu0 0
  %271 = vmatprep.subr.bf16.mxu0 0
  %272 = vmatpush1.bf16.msra.mxu0 0
  %273 = vmatprep.subr.bf16.mxu0 0
  %274 = vmatpush1.bf16.msra.mxu0 0
  %275 = vmatprep.subr.bf16.mxu0 0
  %276 = vmatpush1.bf16.msra.mxu0 0
  %277 = vmatprep.subr.bf16.mxu0 0
  %278 = vmatpush1.bf16.msra.mxu0 0
  %279 = vmatprep.subr.bf16.mxu0 0
  %280 = vmatpush1.bf16.msra.mxu0 0
  %281 = vmatprep.subr.bf16.mxu0 0
  %282 = vmatpush1.bf16.msra.mxu0 0
  %283 = vmatprep.subr.bf16.mxu0 0
  %284 = vmatpush1.bf16.msra.mxu0 0
  %285 = vmatprep.subr.bf16.mxu0 0
  %286 = vmatpush1.bf16.msra.mxu0 0
  %287 = vmatprep.mubr.bf16.mxu0 0
  %288 = vmatmul.mubr.bf16.gmra.mrb[0].mxu0 %v235
  %v289 = vpop.f32.mrb[0].mxu0
  %v290 = vadd.f32 0.0, %v289
  %v291 = vpop.f32.mrb[0].mxu0
  %v292 = vpop.f32.mrb[0].mxu0
  %v293 = vadd.f32 0.0, %v292
  %v294 = vpop.f32.mrb[0].mxu0
  %295 = vmatprep.mubr.bf16.mxu0 0
  %296 = vmatmul.mubr.bf16.gmra.mrb[0].mxu0 %v238
  %v297 = vpop.f32.mrb[0].mxu0
  %v298 = vadd.f32 0.0, %v297
  %v299 = vpop.f32.mrb[0].mxu0
  %v300 = vpop.f32.mrb[0].mxu0
  %v301 = vadd.f32 0.0, %v300
  %v302 = vpop.f32.mrb[0].mxu0
  %303 = vmatprep.mubr.bf16.mxu0 0
  %304 = vmatmul.mubr.bf16.gmra.mrb[0].mxu0 %v241
  %v305 = vpop.f32.mrb[0].mxu0
  %v306 = vadd.f32 0.0, %v305
  %v307 = vpop.f32.mrb[0].mxu0
  %v308 = vpop.f32.mrb[0].mxu0
  %v309 = vadd.f32 0.0, %v308
  %v310 = vpop.f32.mrb[0].mxu0
  %311 = vmatprep.mubr.bf16.mxu0 0
  %312 = vmatmul.mubr.bf16.gmra.mrb[0].mxu0 %v244
  %v313 = vpop.f32.mrb[0].mxu0
  %v314 = vadd.f32 0.0, %v313
  %v315 = vpop.f32.mrb[0].mxu0
  %v316 = vpop.f32.mrb[0].mxu0
  %v317 = vadd.f32 0.0, %v316
  %v318 = vpop.f32.mrb[0].mxu0
  %319 = vmatprep.mubr.bf16.mxu0 0
  %320 = vmatmul.mubr.bf16.gmra.mrb[0].mxu0 %v247
  %v321 = vpop.f32.mrb[0].mxu0
  %v322 = vadd.f32 0.0, %v321
  %v323 = vpop.f32.mrb[0].mxu0
  %v324 = vpop.f32.mrb[0].mxu0
  %v325 = vadd.f32 0.0, %v324
  %v326 = vpop.f32.mrb[0].mxu0
  %327 = vmatprep.mubr.bf16.mxu0 0
  %328 = vmatmul.mubr.bf16.gmra.mrb[0].mxu0 %v250
  %v329 = vpop.f32.mrb[0].mxu0
  %v330 = vadd.f32 0.0, %v329
  %v331 = vpop.f32.mrb[0].mxu0
  %v332 = vpop.f32.mrb[0].mxu0
  %v333 = vadd.f32 0.0, %v332
  %v334 = vpop.f32.mrb[0].mxu0
  %335 = vmatprep.mubr.bf16.mxu0 0
  %336 = vmatmul.mubr.bf16.gmra.mrb[0].mxu0 %v253
  %v337 = vpop.f32.mrb[0].mxu0
  %v338 = vadd.f32 0.0, %v337
  %v339 = vpop.f32.mrb[0].mxu0
  %v340 = vpop.f32.mrb[0].mxu0
  %v341 = vpop.f32.mrb[0].mxu0
  %342 = vdwg.mxu0
  %v343 = vmax.f32 %v134, %v290
  %v344 = vmax.f32 %v137, %v293
  %v345 = vmax.f32 %v142, %v298
  %v346 = vmax.f32 %v145, %v301
  %v347 = vmax.f32 %v150, %v306
  %v348 = vmax.f32 %v153, %v309
  %v349 = vmax.f32 %v158, %v314
  %v350 = vmax.f32 %v161, %v317
  %v351 = vmax.f32 %v166, %v322
  %v352 = vmax.f32 %v169, %v325
  %v353 = vmax.f32 %v174, %v330
  %v354 = vmax.f32 %v177, %v333
  %v355 = vmax.f32 %v182, %v338
  %s356 = scalar_lea.vmem %s0, 104
  %v357 = vld [vmem:[%s356] sm:$0xf]
  %v358 = vld [vmem:[%s356 + $0x4] sm:$0xf]
  %v359 = vld [vmem:[%s356 + $0x8] sm:$0xf]
  %v360 = vld [vmem:[%s356 + $0xc] sm:$0xf]
  %v361 = vld [vmem:[%s356 + $0x10] sm:$0xf]
  %v362 = vld [vmem:[%s356 + $0x14] sm:$0xf]
  %v363 = vld [vmem:[%s356 + $0x18] sm:$0xf]
  %v364 = vld [vmem:[%s356 + $0x1c] sm:$0xf]
  %v365 = vld [vmem:[%s356 + $0x20] sm:$0xf]
  %v366 = vld [vmem:[%s356 + $0x24] sm:$0xf]
  %v367 = vld [vmem:[%s356 + $0x28] sm:$0xf]
  %v368 = vld [vmem:[%s356 + $0x2c] sm:$0xf]
  %v369 = vld [vmem:[%s356 + $0x30] sm:$0xf]
  %v383 = vunpack.c.l.b16 %v357
  %v384 = vunpack.c.l.b16 %v358
  %v385 = vunpack.c.l.b16 %v359
  %v386 = vunpack.c.l.b16 %v360
  %v387 = vunpack.c.l.b16 %v361
  %v388 = vunpack.c.l.b16 %v362
  %v389 = vunpack.c.l.b16 %v363
  %v390 = vunpack.c.l.b16 %v364
  %v391 = vunpack.c.l.b16 %v365
  %v392 = vunpack.c.l.b16 %v366
  %v393 = vunpack.c.l.b16 %v367
  %v394 = vunpack.c.l.b16 %v368
  %v395 = vunpack.c.l.b16 %v369
  %v396 = vpack.c.b16 %v384, %v383
  %v397 = vpack.c.b16 %v386, %v385
  %v398 = vpack.c.b16 %v388, %v387
  %v399 = vpack.c.b16 %v390, %v389
  %v400 = vpack.c.b16 %v392, %v391
  %v401 = vpack.c.b16 %v394, %v393
  %v402 = vpack.c.b16 %v395, %v395
  %v404 = vsel %vm77, %v396, 0
  %v407 = vsel %vm77, %v397, 0
  %v410 = vsel %vm77, %v398, 0
  %v413 = vsel %vm77, %v399, 0
  %v416 = vsel %vm77, %v400, 0
  %v419 = vsel %vm77, %v401, 0
  %v422 = vsel %vm77, %v402, 0
  %424 = vmatprep.subr.bf16.mxu0 0
  %425 = vmatpush1.bf16.msra.mxu0 %v73
  %426 = vmatprep.subr.bf16.mxu0 0
  %427 = vmatpush1.bf16.msra.mxu0 %v74
  %428 = vmatprep.subr.bf16.mxu0 0
  %429 = vmatpush1.bf16.msra.mxu0 0
  %430 = vmatprep.subr.bf16.mxu0 0
  %431 = vmatpush1.bf16.msra.mxu0 0
  %432 = vmatprep.subr.bf16.mxu0 0
  %433 = vmatpush1.bf16.msra.mxu0 0
  %434 = vmatprep.subr.bf16.mxu0 0
  %435 = vmatpush1.bf16.msra.mxu0 0
  %436 = vmatprep.subr.bf16.mxu0 0
  %437 = vmatpush1.bf16.msra.mxu0 0
  %438 = vmatprep.subr.bf16.mxu0 0
  %439 = vmatpush1.bf16.msra.mxu0 0
  %440 = vmatprep.subr.bf16.mxu0 0
  %441 = vmatpush1.bf16.msra.mxu0 0
  %442 = vmatprep.subr.bf16.mxu0 0
  %443 = vmatpush1.bf16.msra.mxu0 0
  %444 = vmatprep.subr.bf16.mxu0 0
  %445 = vmatpush1.bf16.msra.mxu0 0
  %446 = vmatprep.subr.bf16.mxu0 0
  %447 = vmatpush1.bf16.msra.mxu0 0
  %448 = vmatprep.subr.bf16.mxu0 0
  %449 = vmatpush1.bf16.msra.mxu0 0
  %450 = vmatprep.subr.bf16.mxu0 0
  %451 = vmatpush1.bf16.msra.mxu0 0
  %452 = vmatprep.subr.bf16.mxu0 0
  %453 = vmatpush1.bf16.msra.mxu0 0
  %454 = vmatprep.subr.bf16.mxu0 0
  %455 = vmatpush1.bf16.msra.mxu0 0
  %456 = vmatprep.mubr.bf16.mxu0 0
  %457 = vmatmul.mubr.bf16.gmra.mrb[0].mxu0 %v404
  %v458 = vpop.f32.mrb[0].mxu0
  %v459 = vadd.f32 0.0, %v458
  %v460 = vpop.f32.mrb[0].mxu0
  %v461 = vpop.f32.mrb[0].mxu0
  %v462 = vadd.f32 0.0, %v461
  %v463 = vpop.f32.mrb[0].mxu0
  %464 = vmatprep.mubr.bf16.mxu0 0
  %465 = vmatmul.mubr.bf16.gmra.mrb[0].mxu0 %v407
  %v466 = vpop.f32.mrb[0].mxu0
  %v467 = vadd.f32 0.0, %v466
  %v468 = vpop.f32.mrb[0].mxu0
  %v469 = vpop.f32.mrb[0].mxu0
  %v470 = vadd.f32 0.0, %v469
  %v471 = vpop.f32.mrb[0].mxu0
  %472 = vmatprep.mubr.bf16.mxu0 0
  %473 = vmatmul.mubr.bf16.gmra.mrb[0].mxu0 %v410
  %v474 = vpop.f32.mrb[0].mxu0
  %v475 = vadd.f32 0.0, %v474
  %v476 = vpop.f32.mrb[0].mxu0
  %v477 = vpop.f32.mrb[0].mxu0
  %v478 = vadd.f32 0.0, %v477
  %v479 = vpop.f32.mrb[0].mxu0
  %480 = vmatprep.mubr.bf16.mxu0 0
  %481 = vmatmul.mubr.bf16.gmra.mrb[0].mxu0 %v413
  %v482 = vpop.f32.mrb[0].mxu0
  %v483 = vadd.f32 0.0, %v482
  %v484 = vpop.f32.mrb[0].mxu0
  %v485 = vpop.f32.mrb[0].mxu0
  %v486 = vadd.f32 0.0, %v485
  %v487 = vpop.f32.mrb[0].mxu0
  %488 = vmatprep.mubr.bf16.mxu0 0
  %489 = vmatmul.mubr.bf16.gmra.mrb[0].mxu0 %v416
  %v490 = vpop.f32.mrb[0].mxu0
  %v491 = vadd.f32 0.0, %v490
  %v492 = vpop.f32.mrb[0].mxu0
  %v493 = vpop.f32.mrb[0].mxu0
  %v494 = vadd.f32 0.0, %v493
  %v495 = vpop.f32.mrb[0].mxu0
  %496 = vmatprep.mubr.bf16.mxu0 0
  %497 = vmatmul.mubr.bf16.gmra.mrb[0].mxu0 %v419
  %v498 = vpop.f32.mrb[0].mxu0
  %v499 = vadd.f32 0.0, %v498
  %v500 = vpop.f32.mrb[0].mxu0
  %v501 = vpop.f32.mrb[0].mxu0
  %v502 = vadd.f32 0.0, %v501
  %v503 = vpop.f32.mrb[0].mxu0
  %504 = vmatprep.mubr.bf16.mxu0 0
  %505 = vmatmul.mubr.bf16.gmra.mrb[0].mxu0 %v422
  %v506 = vpop.f32.mrb[0].mxu0
  %v507 = vadd.f32 0.0, %v506
  %v508 = vpop.f32.mrb[0].mxu0
  %v509 = vpop.f32.mrb[0].mxu0
  %v510 = vpop.f32.mrb[0].mxu0
  %511 = vdwg.mxu0
  %v512 = vmax.f32 %v343, %v459
  %v513 = vmax.f32 %v344, %v462
  %v514 = vmax.f32 %v345, %v467
  %v515 = vmax.f32 %v346, %v470
  %v516 = vmax.f32 %v347, %v475
  %v517 = vmax.f32 %v348, %v478
  %v518 = vmax.f32 %v349, %v483
  %v519 = vmax.f32 %v350, %v486
  %v520 = vmax.f32 %v351, %v491
  %v521 = vmax.f32 %v352, %v494
  %v522 = vmax.f32 %v353, %v499
  %v523 = vmax.f32 %v354, %v502
  %v524 = vmax.f32 %v355, %v507
  %s525 = scalar_lea.vmem %s0, 156
  %v526 = vld [vmem:[%s525] sm:$0xf]
  %v527 = vld [vmem:[%s525 + $0x4] sm:$0xf]
  %v528 = vld [vmem:[%s525 + $0x8] sm:$0xf]
  %v529 = vld [vmem:[%s525 + $0xc] sm:$0xf]
  %v530 = vld [vmem:[%s525 + $0x10] sm:$0xf]
  %v531 = vld [vmem:[%s525 + $0x14] sm:$0xf]
  %v532 = vld [vmem:[%s525 + $0x18] sm:$0xf]
  %v533 = vld [vmem:[%s525 + $0x1c] sm:$0xf]
  %v534 = vld [vmem:[%s525 + $0x20] sm:$0xf]
  %v535 = vld [vmem:[%s525 + $0x24] sm:$0xf]
  %v536 = vld [vmem:[%s525 + $0x28] sm:$0xf]
  %v537 = vld [vmem:[%s525 + $0x2c] sm:$0xf]
  %v538 = vld [vmem:[%s525 + $0x30] sm:$0xf]
  %v552 = vunpack.c.l.b16 %v526
  %v553 = vunpack.c.l.b16 %v527
  %v554 = vunpack.c.l.b16 %v528
  %v555 = vunpack.c.l.b16 %v529
  %v556 = vunpack.c.l.b16 %v530
  %v557 = vunpack.c.l.b16 %v531
  %v558 = vunpack.c.l.b16 %v532
  %v559 = vunpack.c.l.b16 %v533
  %v560 = vunpack.c.l.b16 %v534
  %v561 = vunpack.c.l.b16 %v535
  %v562 = vunpack.c.l.b16 %v536
  %v563 = vunpack.c.l.b16 %v537
  %v564 = vunpack.c.l.b16 %v538
  %v565 = vpack.c.b16 %v553, %v552
  %v566 = vpack.c.b16 %v555, %v554
  %v567 = vpack.c.b16 %v557, %v556
  %v568 = vpack.c.b16 %v559, %v558
  %v569 = vpack.c.b16 %v561, %v560
  %v570 = vpack.c.b16 %v563, %v562
  %v571 = vpack.c.b16 %v564, %v564
  %v573 = vsel %vm77, %v565, 0
  %v576 = vsel %vm77, %v566, 0
  %v579 = vsel %vm77, %v567, 0
  %v582 = vsel %vm77, %v568, 0
  %v585 = vsel %vm77, %v569, 0
  %v588 = vsel %vm77, %v570, 0
  %v591 = vsel %vm77, %v571, 0
  %593 = vmatprep.subr.bf16.mxu0 0
  %594 = vmatpush1.bf16.msra.mxu0 %v73
  %595 = vmatprep.subr.bf16.mxu0 0
  %596 = vmatpush1.bf16.msra.mxu0 %v74
  %597 = vmatprep.subr.bf16.mxu0 0
  %598 = vmatpush1.bf16.msra.mxu0 0
  %599 = vmatprep.subr.bf16.mxu0 0
  %600 = vmatpush1.bf16.msra.mxu0 0
  %601 = vmatprep.subr.bf16.mxu0 0
  %602 = vmatpush1.bf16.msra.mxu0 0
  %603 = vmatprep.subr.bf16.mxu0 0
  %604 = vmatpush1.bf16.msra.mxu0 0
  %605 = vmatprep.subr.bf16.mxu0 0
  %606 = vmatpush1.bf16.msra.mxu0 0
  %607 = vmatprep.subr.bf16.mxu0 0
  %608 = vmatpush1.bf16.msra.mxu0 0
  %609 = vmatprep.subr.bf16.mxu0 0
  %610 = vmatpush1.bf16.msra.mxu0 0
  %611 = vmatprep.subr.bf16.mxu0 0
  %612 = vmatpush1.bf16.msra.mxu0 0
  %613 = vmatprep.subr.bf16.mxu0 0
  %614 = vmatpush1.bf16.msra.mxu0 0
  %615 = vmatprep.subr.bf16.mxu0 0
  %616 = vmatpush1.bf16.msra.mxu0 0
  %617 = vmatprep.subr.bf16.mxu0 0
  %618 = vmatpush1.bf16.msra.mxu0 0
  %619 = vmatprep.subr.bf16.mxu0 0
  %620 = vmatpush1.bf16.msra.mxu0 0
  %621 = vmatprep.subr.bf16.mxu0 0
  %622 = vmatpush1.bf16.msra.mxu0 0
  %623 = vmatprep.subr.bf16.mxu0 0
  %624 = vmatpush1.bf16.msra.mxu0 0
  %625 = vmatprep.mubr.bf16.mxu0 0
  %626 = vmatmul.mubr.bf16.gmra.mrb[0].mxu0 %v573
  %v627 = vpop.f32.mrb[0].mxu0
  %v628 = vadd.f32 0.0, %v627
  %v629 = vpop.f32.mrb[0].mxu0
  %v630 = vpop.f32.mrb[0].mxu0
  %v631 = vadd.f32 0.0, %v630
  %v632 = vpop.f32.mrb[0].mxu0
  %633 = vmatprep.mubr.bf16.mxu0 0
  %634 = vmatmul.mubr.bf16.gmra.mrb[0].mxu0 %v576
  %v635 = vpop.f32.mrb[0].mxu0
  %v636 = vadd.f32 0.0, %v635
  %v637 = vpop.f32.mrb[0].mxu0
  %v638 = vpop.f32.mrb[0].mxu0
  %v639 = vadd.f32 0.0, %v638
  %v640 = vpop.f32.mrb[0].mxu0
  %641 = vmatprep.mubr.bf16.mxu0 0
  %642 = vmatmul.mubr.bf16.gmra.mrb[0].mxu0 %v579
  %v643 = vpop.f32.mrb[0].mxu0
  %v644 = vadd.f32 0.0, %v643
  %v645 = vpop.f32.mrb[0].mxu0
  %v646 = vpop.f32.mrb[0].mxu0
  %v647 = vadd.f32 0.0, %v646
  %v648 = vpop.f32.mrb[0].mxu0
  %649 = vmatprep.mubr.bf16.mxu0 0
  %650 = vmatmul.mubr.bf16.gmra.mrb[0].mxu0 %v582
  %v651 = vpop.f32.mrb[0].mxu0
  %v652 = vadd.f32 0.0, %v651
  %v653 = vpop.f32.mrb[0].mxu0
  %v654 = vpop.f32.mrb[0].mxu0
  %v655 = vadd.f32 0.0, %v654
  %v656 = vpop.f32.mrb[0].mxu0
  %657 = vmatprep.mubr.bf16.mxu0 0
  %658 = vmatmul.mubr.bf16.gmra.mrb[0].mxu0 %v585
  %v659 = vpop.f32.mrb[0].mxu0
  %v660 = vadd.f32 0.0, %v659
  %v661 = vpop.f32.mrb[0].mxu0
  %v662 = vpop.f32.mrb[0].mxu0
  %v663 = vadd.f32 0.0, %v662
  %v664 = vpop.f32.mrb[0].mxu0
  %665 = vmatprep.mubr.bf16.mxu0 0
  %666 = vmatmul.mubr.bf16.gmra.mrb[0].mxu0 %v588
  %v667 = vpop.f32.mrb[0].mxu0
  %v668 = vadd.f32 0.0, %v667
  %v669 = vpop.f32.mrb[0].mxu0
  %v670 = vpop.f32.mrb[0].mxu0
  %v671 = vadd.f32 0.0, %v670
  %v672 = vpop.f32.mrb[0].mxu0
  %673 = vmatprep.mubr.bf16.mxu0 0
  %674 = vmatmul.mubr.bf16.gmra.mrb[0].mxu0 %v591
  %v675 = vpop.f32.mrb[0].mxu0
  %v676 = vadd.f32 0.0, %v675
  %v677 = vpop.f32.mrb[0].mxu0
  %v678 = vpop.f32.mrb[0].mxu0
  %v679 = vpop.f32.mrb[0].mxu0
  %680 = vdwg.mxu0
  %v681 = vmax.f32 %v512, %v628
  %v682 = vmax.f32 %v513, %v631
  %v683 = vmax.f32 %v514, %v636
  %v684 = vmax.f32 %v515, %v639
  %v685 = vmax.f32 %v516, %v644
  %v686 = vmax.f32 %v517, %v647
  %v687 = vmax.f32 %v518, %v652
  %v688 = vmax.f32 %v519, %v655
  %v689 = vmax.f32 %v520, %v660
  %v690 = vmax.f32 %v521, %v663
  %v691 = vmax.f32 %v522, %v668
  %v692 = vmax.f32 %v523, %v671
  %v693 = vmax.f32 %v524, %v676
  %v694 = vld [vmem:[%s2] sm:$0x1]
  %v696 = vlaneseq
  %v697 = vshrl.u32 %v696, 7
  %v698 = vsub.s32 0, %v697
  %v699 = vrot.slane %v694, %v698
  %v701 = vadd.f32 %v681, %v699
  %v702 = vadd.f32 %v682, %v699
  %v703 = vadd.f32 %v683, %v699
  %v704 = vadd.f32 %v684, %v699
  %v705 = vadd.f32 %v685, %v699
  %v706 = vadd.f32 %v686, %v699
  %v707 = vadd.f32 %v687, %v699
  %v708 = vadd.f32 %v688, %v699
  %v709 = vadd.f32 %v689, %v699
  %v710 = vadd.f32 %v690, %v699
  %v711 = vadd.f32 %v691, %v699
  %v712 = vadd.f32 %v692, %v699
  %v713 = vadd.f32 %v693, %v699
  %v714 = vmax.f32 %v701, 0.0
  %v715 = vmax.f32 %v702, 0.0
  %v716 = vmax.f32 %v703, 0.0
  %v717 = vmax.f32 %v704, 0.0
  %v718 = vmax.f32 %v705, 0.0
  %v719 = vmax.f32 %v706, 0.0
  %v720 = vmax.f32 %v707, 0.0
  %v721 = vmax.f32 %v708, 0.0
  %v722 = vmax.f32 %v709, 0.0
  %v723 = vmax.f32 %v710, 0.0
  %v724 = vmax.f32 %v711, 0.0
  %v725 = vmax.f32 %v712, 0.0
  %v726 = vmax.f32 %v713, 0.0
  %v727 = vpack.c.bf16 %v715, %v714
  %v728 = vpack.c.bf16 %v717, %v716
  %v729 = vpack.c.bf16 %v719, %v718
  %v730 = vpack.c.bf16 %v721, %v720
  %v731 = vpack.c.bf16 %v723, %v722
  %v732 = vpack.c.bf16 %v725, %v724
  %v733 = vpack.c.bf16 %v726, %v726
  %v741 = vunpack.c.l.b16 %v727
  %v742 = vunpack.c.h.b16 %v727
  %v743 = vunpack.c.l.b16 %v728
  %v744 = vunpack.c.h.b16 %v728
  %v745 = vunpack.c.l.b16 %v729
  %v746 = vunpack.c.h.b16 %v729
  %v747 = vunpack.c.l.b16 %v730
  %v748 = vunpack.c.h.b16 %v730
  %v749 = vunpack.c.l.b16 %v731
  %v750 = vunpack.c.h.b16 %v731
  %v751 = vunpack.c.l.b16 %v732
  %v752 = vunpack.c.h.b16 %v732
  %v753 = vunpack.c.l.b16 %v733
  %v754 = vpack.c.b16 %v741, %v741
  %v755 = vpack.c.b16 %v742, %v742
  %v756 = vpack.c.b16 %v743, %v743
  %v757 = vpack.c.b16 %v744, %v744
  %v758 = vpack.c.b16 %v745, %v745
  %v759 = vpack.c.b16 %v746, %v746
  %v760 = vpack.c.b16 %v747, %v747
  %v761 = vpack.c.b16 %v748, %v748
  %v762 = vpack.c.b16 %v749, %v749
  %v763 = vpack.c.b16 %v750, %v750
  %v764 = vpack.c.b16 %v751, %v751
  %v765 = vpack.c.b16 %v752, %v752
  %v766 = vpack.c.b16 %v753, %v753
  %780 = vst [vmem:[%s3] sm:$0xf] %v754
  %781 = vst [vmem:[%s3 + $0x4] sm:$0xf] %v755
  %782 = vst [vmem:[%s3 + $0x8] sm:$0xf] %v756
  %783 = vst [vmem:[%s3 + $0xc] sm:$0xf] %v757
  %784 = vst [vmem:[%s3 + $0x10] sm:$0xf] %v758
  %785 = vst [vmem:[%s3 + $0x14] sm:$0xf] %v759
  %786 = vst [vmem:[%s3 + $0x18] sm:$0xf] %v760
  %787 = vst [vmem:[%s3 + $0x1c] sm:$0xf] %v761
  %788 = vst [vmem:[%s3 + $0x20] sm:$0xf] %v762
  %789 = vst [vmem:[%s3 + $0x24] sm:$0xf] %v763
  %790 = vst [vmem:[%s3 + $0x28] sm:$0xf] %v764
  %791 = vst [vmem:[%s3 + $0x2c] sm:$0xf] %v765
  %792 = vst [vmem:[%s3 + $0x30] sm:$0xf] %v766
  // Predicated region
  $region14: #{classify_net_forward.3} parent=0 // pred_check
    _
  $region15: #{classify_net_forward.3} parent=0 // pred_check_branch
    %794 = sbr.rel (0) target = $region17
  $region16: #{classify_net_forward.3} parent=0 // pred_region
    _
  $region17: #{classify_net_forward.3} parent=0 // pred_fallthru
    _
  // Predicated region
  $region18: #{classify_net_forward.3} parent=0 // pred_check
    _
  $region19: #{classify_net_forward.3} parent=0 // pred_check_branch
    %796 = sbr.rel (0) target = $region21
  $region20: #{classify_net_forward.3} parent=0 // pred_region
    _
  $region21: #{classify_net_forward.3} parent=0 // pred_fallthru
    _

// kernel: classify_net_forward.5
$region0: #{classify_net_forward.5}
  #allocation0 [shape = 'u32[]', space=smem, size = 0x4, offset = 0x4, fixed_abs, tag = 'smem constant byte address 0x4 - core index']
  #allocation1 [shape = 'u32[144,128]{1,0:T(1,128)}', space=vmem, size = 0x12000, scoped, tag = 'internal scratch']
  %s0 = inlined_call_operand.vmem [shape: bf16[8,512], index: 0, kind: input, shape index: {}]
  %s1 = inlined_call_operand.vmem [shape: bf16[512,128], index: 1, kind: input, shape index: {}]
  %s2 = inlined_call_operand.vmem [shape: f32[1,128], index: 2, kind: input, shape index: {}]
  %s3 = inlined_call_operand.vmem [shape: bf16[128,128], index: 3, kind: input, shape index: {}]
  %s4 = inlined_call_operand.vmem [shape: f32[1,128], index: 4, kind: input, shape index: {}]
  %s5 = inlined_call_operand.vmem [shape: f32[8,128], index: 5, kind: output, shape index: {}]
  %s6 = sld [smem:[#allocation0]]
  $region30: #{classify_net_forward.5} parent=0
    _
  %s8 = ssub.s32 1, %s6
  %s9 = scalar_select 0, %s8, %s6
  // Predicated region
  $region2: #{classify_net_forward.5} parent=0 // pred_check
    _
  $region3: #{classify_net_forward.5} parent=0 // pred_check_branch
    %11 = sbr.rel (0) target = $region5
  $region4: #{classify_net_forward.5} parent=0 // pred_region
    _
  $region5: #{classify_net_forward.5} parent=0 // pred_fallthru
    _
  // Predicated region
  $region6: #{classify_net_forward.5} parent=0 // pred_check
    _
  $region7: #{classify_net_forward.5} parent=0 // pred_check_branch
    %13 = sbr.rel (0) target = $region9
  $region8: #{classify_net_forward.5} parent=0 // pred_region
    _
  $region9: #{classify_net_forward.5} parent=0 // pred_fallthru
    _
  // Predicated region
  $region10: #{classify_net_forward.5} parent=0 // pred_check
    _
  $region11: #{classify_net_forward.5} parent=0 // pred_check_branch
    %15 = sbr.rel (0) target = $region13
  $region12: #{classify_net_forward.5} parent=0 // pred_region
    _
  $region13: #{classify_net_forward.5} parent=0 // pred_fallthru
    _
  // Predicated region
  $region14: #{classify_net_forward.5} parent=0 // pred_check
    _
  $region15: #{classify_net_forward.5} parent=0 // pred_check_branch
    %17 = sbr.rel (0) target = $region17
  $region16: #{classify_net_forward.5} parent=0 // pred_region
    _
  $region17: #{classify_net_forward.5} parent=0 // pred_fallthru
    _
  // Predicated region
  $region18: #{classify_net_forward.5} parent=0 // pred_check
    _
  $region19: #{classify_net_forward.5} parent=0 // pred_check_branch
    %19 = sbr.rel (0) target = $region21
  $region20: #{classify_net_forward.5} parent=0 // pred_region
    _
  $region21: #{classify_net_forward.5} parent=0 // pred_fallthru
    _
  %v21 = vld [vmem:[%s0] sm:$0xff]
  %v22 = vld [vmem:[%s0 + $0x8] sm:$0xff]
  %v23 = vld [vmem:[%s1] sm:$0xf]
  %v24 = vld [vmem:[%s1 + $0x4] sm:$0xf]
  %v25 = vld [vmem:[%s1 + $0x8] sm:$0xf]
  %v26 = vld [vmem:[%s1 + $0xc] sm:$0xf]
  %v27 = vld [vmem:[%s1 + $0x10] sm:$0xf]
  %v28 = vld [vmem:[%s1 + $0x14] sm:$0xf]
  %v29 = vld [vmem:[%s1 + $0x18] sm:$0xf]
  %v30 = vld [vmem:[%s1 + $0x1c] sm:$0xf]
  %v31 = vld [vmem:[%s1 + $0x20] sm:$0xf]
  %v32 = vld [vmem:[%s1 + $0x24] sm:$0xf]
  %v33 = vld [vmem:[%s1 + $0x28] sm:$0xf]
  %v34 = vld [vmem:[%s1 + $0x2c] sm:$0xf]
  %v35 = vld [vmem:[%s1 + $0x30] sm:$0xf]
  %v36 = vld [vmem:[%s1 + $0x34] sm:$0xf]
  %v37 = vld [vmem:[%s1 + $0x38] sm:$0xf]
  %v38 = vld [vmem:[%s1 + $0x3c] sm:$0xf]
  %v39 = vld [vmem:[%s1 + $0x40] sm:$0xf]
  %v40 = vld [vmem:[%s1 + $0x44] sm:$0xf]
  %v41 = vld [vmem:[%s1 + $0x48] sm:$0xf]
  %v42 = vld [vmem:[%s1 + $0x4c] sm:$0xf]
  %v43 = vld [vmem:[%s1 + $0x50] sm:$0xf]
  %v44 = vld [vmem:[%s1 + $0x54] sm:$0xf]
  %v45 = vld [vmem:[%s1 + $0x58] sm:$0xf]
  %v46 = vld [vmem:[%s1 + $0x5c] sm:$0xf]
  %v47 = vld [vmem:[%s1 + $0x60] sm:$0xf]
  %v48 = vld [vmem:[%s1 + $0x64] sm:$0xf]
  %v49 = vld [vmem:[%s1 + $0x68] sm:$0xf]
  %v50 = vld [vmem:[%s1 + $0x6c] sm:$0xf]
  %v51 = vld [vmem:[%s1 + $0x70] sm:$0xf]
  %v52 = vld [vmem:[%s1 + $0x74] sm:$0xf]
  %v53 = vld [vmem:[%s1 + $0x78] sm:$0xf]
  %v54 = vld [vmem:[%s1 + $0x7c] sm:$0xf]
  %v55 = vld [vmem:[%s1 + $0x80] sm:$0xf]
  %v56 = vld [vmem:[%s1 + $0x84] sm:$0xf]
  %v57 = vld [vmem:[%s1 + $0x88] sm:$0xf]
  %v58 = vld [vmem:[%s1 + $0x8c] sm:$0xf]
  %v59 = vld [vmem:[%s1 + $0x90] sm:$0xf]
  %v60 = vld [vmem:[%s1 + $0x94] sm:$0xf]
  %v61 = vld [vmem:[%s1 + $0x98] sm:$0xf]
  %v62 = vld [vmem:[%s1 + $0x9c] sm:$0xf]
  %v63 = vld [vmem:[%s1 + $0xa0] sm:$0xf]
  %v64 = vld [vmem:[%s1 + $0xa4] sm:$0xf]
  %v65 = vld [vmem:[%s1 + $0xa8] sm:$0xf]
  %v66 = vld [vmem:[%s1 + $0xac] sm:$0xf]
  %v67 = vld [vmem:[%s1 + $0xb0] sm:$0xf]
  %v68 = vld [vmem:[%s1 + $0xb4] sm:$0xf]
  %v69 = vld [vmem:[%s1 + $0xb8] sm:$0xf]
  %v70 = vld [vmem:[%s1 + $0xbc] sm:$0xf]
  %v71 = vld [vmem:[%s1 + $0xc0] sm:$0xf]
  %v72 = vld [vmem:[%s1 + $0xc4] sm:$0xf]
  %v73 = vld [vmem:[%s1 + $0xc8] sm:$0xf]
  %v74 = vld [vmem:[%s1 + $0xcc] sm:$0xf]
  %v75 = vld [vmem:[%s1 + $0xd0] sm:$0xf]
  %v76 = vld [vmem:[%s1 + $0xd4] sm:$0xf]
  %v77 = vld [vmem:[%s1 + $0xd8] sm:$0xf]
  %v78 = vld [vmem:[%s1 + $0xdc] sm:$0xf]
  %v79 = vld [vmem:[%s1 + $0xe0] sm:$0xf]
  %v80 = vld [vmem:[%s1 + $0xe4] sm:$0xf]
  %v81 = vld [vmem:[%s1 + $0xe8] sm:$0xf]
  %v82 = vld [vmem:[%s1 + $0xec] sm:$0xf]
  %v83 = vld [vmem:[%s1 + $0xf0] sm:$0xf]
  %v84 = vld [vmem:[%s1 + $0xf4] sm:$0xf]
  %v85 = vld [vmem:[%s1 + $0xf8] sm:$0xf]
  %v86 = vld [vmem:[%s1 + $0xfc] sm:$0xf]
  %v87 = vld [vmem:[%s2] sm:$0x1]
  %v89 = vlaneseq
  %v90 = vshrl.u32 %v89, 7
  %v91 = vsub.s32 0, %v90
  %v92 = vrot.slane %v87, %v91
  %v96 = vunpack.c.l.b16 %v21
  %v97 = vunpack.c.h.b16 %v21
  %v98 = vunpack.c.l.b16 %v22
  %v99 = vunpack.c.h.b16 %v22
  %v100 = vpack.c.b16 %v96, %v96
  %v101 = vpack.c.b16 %v97, %v97
  %v102 = vpack.c.b16 %v98, %v98
  %v103 = vpack.c.b16 %v99, %v99
  %v172 = vunpack.c.l.b16 %v23
  %v173 = vunpack.c.l.b16 %v24
  %v174 = vunpack.c.l.b16 %v25
  %v175 = vunpack.c.l.b16 %v26
  %v176 = vunpack.c.l.b16 %v27
  %v177 = vunpack.c.l.b16 %v28
  %v178 = vunpack.c.l.b16 %v29
  %v179 = vunpack.c.l.b16 %v30
  %v180 = vunpack.c.l.b16 %v31
  %v181 = vunpack.c.l.b16 %v32
  %v182 = vunpack.c.l.b16 %v33
  %v183 = vunpack.c.l.b16 %v34
  %v184 = vunpack.c.l.b16 %v35
  %v185 = vunpack.c.l.b16 %v36
  %v186 = vunpack.c.l.b16 %v37
  %v187 = vunpack.c.l.b16 %v38
  %v188 = vunpack.c.l.b16 %v39
  %v189 = vunpack.c.l.b16 %v40
  %v190 = vunpack.c.l.b16 %v41
  %v191 = vunpack.c.l.b16 %v42
  %v192 = vunpack.c.l.b16 %v43
  %v193 = vunpack.c.l.b16 %v44
  %v194 = vunpack.c.l.b16 %v45
  %v195 = vunpack.c.l.b16 %v46
  %v196 = vunpack.c.l.b16 %v47
  %v197 = vunpack.c.l.b16 %v48
  %v198 = vunpack.c.l.b16 %v49
  %v199 = vunpack.c.l.b16 %v50
  %v200 = vunpack.c.l.b16 %v51
  %v201 = vunpack.c.l.b16 %v52
  %v202 = vunpack.c.l.b16 %v53
  %v203 = vunpack.c.l.b16 %v54
  %v204 = vunpack.c.l.b16 %v55
  %v205 = vunpack.c.l.b16 %v56
  %v206 = vunpack.c.l.b16 %v57
  %v207 = vunpack.c.l.b16 %v58
  %v208 = vunpack.c.l.b16 %v59
  %v209 = vunpack.c.l.b16 %v60
  %v210 = vunpack.c.l.b16 %v61
  %v211 = vunpack.c.l.b16 %v62
  %v212 = vunpack.c.l.b16 %v63
  %v213 = vunpack.c.l.b16 %v64
  %v214 = vunpack.c.l.b16 %v65
  %v215 = vunpack.c.l.b16 %v66
  %v216 = vunpack.c.l.b16 %v67
  %v217 = vunpack.c.l.b16 %v68
  %v218 = vunpack.c.l.b16 %v69
  %v219 = vunpack.c.l.b16 %v70
  %v220 = vunpack.c.l.b16 %v71
  %v221 = vunpack.c.l.b16 %v72
  %v222 = vunpack.c.l.b16 %v73
  %v223 = vunpack.c.l.b16 %v74
  %v224 = vunpack.c.l.b16 %v75
  %v225 = vunpack.c.l.b16 %v76
  %v226 = vunpack.c.l.b16 %v77
  %v227 = vunpack.c.l.b16 %v78
  %v228 = vunpack.c.l.b16 %v79
  %v229 = vunpack.c.l.b16 %v80
  %v230 = vunpack.c.l.b16 %v81
  %v231 = vunpack.c.l.b16 %v82
  %v232 = vunpack.c.l.b16 %v83
  %v233 = vunpack.c.l.b16 %v84
  %v234 = vunpack.c.l.b16 %v85
  %v235 = vunpack.c.l.b16 %v86
  %v236 = vpack.c.b16 %v173, %v172
  %v237 = vpack.c.b16 %v175, %v174
  %v238 = vpack.c.b16 %v177, %v176
  %v239 = vpack.c.b16 %v179, %v178
  %v240 = vpack.c.b16 %v181, %v180
  %v241 = vpack.c.b16 %v183, %v182
  %v242 = vpack.c.b16 %v185, %v184
  %v243 = vpack.c.b16 %v187, %v186
  %v244 = vpack.c.b16 %v189, %v188
  %v245 = vpack.c.b16 %v191, %v190
  %v246 = vpack.c.b16 %v193, %v192
  %v247 = vpack.c.b16 %v195, %v194
  %v248 = vpack.c.b16 %v197, %v196
  %v249 = vpack.c.b16 %v199, %v198
  %v250 = vpack.c.b16 %v201, %v200
  %v251 = vpack.c.b16 %v203, %v202
  %v252 = vpack.c.b16 %v205, %v204
  %v253 = vpack.c.b16 %v207, %v206
  %v254 = vpack.c.b16 %v209, %v208
  %v255 = vpack.c.b16 %v211, %v210
  %v256 = vpack.c.b16 %v213, %v212
  %v257 = vpack.c.b16 %v215, %v214
  %v258 = vpack.c.b16 %v217, %v216
  %v259 = vpack.c.b16 %v219, %v218
  %v260 = vpack.c.b16 %v221, %v220
  %v261 = vpack.c.b16 %v223, %v222
  %v262 = vpack.c.b16 %v225, %v224
  %v263 = vpack.c.b16 %v227, %v226
  %v264 = vpack.c.b16 %v229, %v228
  %v265 = vpack.c.b16 %v231, %v230
  %v266 = vpack.c.b16 %v233, %v232
  %v267 = vpack.c.b16 %v235, %v234
  %300 = vmatprep.subr.bf16.mxu0 0
  %301 = vmatpush1.bf16.msra.mxu0 %v236
  %302 = vmatprep.subr.bf16.mxu0 0
  %303 = vmatpush1.bf16.msra.mxu0 %v237
  %304 = vmatprep.subr.bf16.mxu0 0
  %305 = vmatpush1.bf16.msra.mxu0 %v238
  %306 = vmatprep.subr.bf16.mxu0 0
  %307 = vmatpush1.bf16.msra.mxu0 %v239
  %308 = vmatprep.subr.bf16.mxu0 0
  %309 = vmatpush1.bf16.msra.mxu0 %v240
  %310 = vmatprep.subr.bf16.mxu0 0
  %311 = vmatpush1.bf16.msra.mxu0 %v241
  %312 = vmatprep.subr.bf16.mxu0 0
  %313 = vmatpush1.bf16.msra.mxu0 %v242
  %314 = vmatprep.subr.bf16.mxu0 0
  %315 = vmatpush1.bf16.msra.mxu0 %v243
  %316 = vmatprep.subr.bf16.mxu0 0
  %317 = vmatpush1.bf16.msra.mxu0 %v244
  %318 = vmatprep.subr.bf16.mxu0 0
  %319 = vmatpush1.bf16.msra.mxu0 %v245
  %320 = vmatprep.subr.bf16.mxu0 0
  %321 = vmatpush1.bf16.msra.mxu0 %v246
  %322 = vmatprep.subr.bf16.mxu0 0
  %323 = vmatpush1.bf16.msra.mxu0 %v247
  %324 = vmatprep.subr.bf16.mxu0 0
  %325 = vmatpush1.bf16.msra.mxu0 %v248
  %326 = vmatprep.subr.bf16.mxu0 0
  %327 = vmatpush1.bf16.msra.mxu0 %v249
  %328 = vmatprep.subr.bf16.mxu0 0
  %329 = vmatpush1.bf16.msra.mxu0 %v250
  %330 = vmatprep.subr.bf16.mxu0 0
  %331 = vmatpush1.bf16.msra.mxu0 %v251
  %332 = vmatprep.mubr.bf16.mxu0 %v101
  %333 = vmatmul.mubr.bf16.gmra.mrb[0].mxu0 %v100
  %v334 = vpop.f32.mrb[0].mxu0
  %v335 = vadd.f32 %v92, %v334
  %v336 = vpop.f32.mrb[0].mxu0
  %v337 = vpop.f32.mrb[0].mxu0
  %v338 = vpop.f32.mrb[0].mxu0
  %339 = vdwg.mxu0
  %340 = vmatprep.subr.bf16.mxu0 0
  %341 = vmatpush1.bf16.msra.mxu0 %v252
  %342 = vmatprep.subr.bf16.mxu0 0
  %343 = vmatpush1.bf16.msra.mxu0 %v253
  %344 = vmatprep.subr.bf16.mxu0 0
  %345 = vmatpush1.bf16.msra.mxu0 %v254
  %346 = vmatprep.subr.bf16.mxu0 0
  %347 = vmatpush1.bf16.msra.mxu0 %v255
  %348 = vmatprep.subr.bf16.mxu0 0
  %349 = vmatpush1.bf16.msra.mxu0 %v256
  %350 = vmatprep.subr.bf16.mxu0 0
  %351 = vmatpush1.bf16.msra.mxu0 %v257
  %352 = vmatprep.subr.bf16.mxu0 0
  %353 = vmatpush1.bf16.msra.mxu0 %v258
  %354 = vmatprep.subr.bf16.mxu0 0
  %355 = vmatpush1.bf16.msra.mxu0 %v259
  %356 = vmatprep.subr.bf16.mxu0 0
  %357 = vmatpush1.bf16.msra.mxu0 %v260
  %358 = vmatprep.subr.bf16.mxu0 0
  %359 = vmatpush1.bf16.msra.mxu0 %v261
  %360 = vmatprep.subr.bf16.mxu0 0
  %361 = vmatpush1.bf16.msra.mxu0 %v262
  %362 = vmatprep.subr.bf16.mxu0 0
  %363 = vmatpush1.bf16.msra.mxu0 %v263
  %364 = vmatprep.subr.bf16.mxu0 0
  %365 = vmatpush1.bf16.msra.mxu0 %v264
  %366 = vmatprep.subr.bf16.mxu0 0
  %367 = vmatpush1.bf16.msra.mxu0 %v265
  %368 = vmatprep.subr.bf16.mxu0 0
  %369 = vmatpush1.bf16.msra.mxu0 %v266
  %370 = vmatprep.subr.bf16.mxu0 0
  %371 = vmatpush1.bf16.msra.mxu0 %v267
  %372 = vmatprep.mubr.bf16.mxu0 %v103
  %373 = vmatmul.mubr.bf16.gmra.mrb[0].mxu0 %v102
  %v374 = vpop.f32.mrb[0].mxu0
  %v375 = vadd.f32 %v335, %v374
  %v376 = vpop.f32.mrb[0].mxu0
  %v377 = vpop.f32.mrb[0].mxu0
  %v378 = vpop.f32.mrb[0].mxu0
  %379 = vdwg.mxu0
  %v380 = vmax.f32 %v375, 0.0
  %v381 = vpack.c.bf16 %v380, %v380
  %v382 = vld [vmem:[%s3] sm:$0xf]
  %v383 = vld [vmem:[%s3 + $0x4] sm:$0xf]
  %v384 = vld [vmem:[%s3 + $0x8] sm:$0xf]
  %v385 = vld [vmem:[%s3 + $0xc] sm:$0xf]
  %v386 = vld [vmem:[%s3 + $0x10] sm:$0xf]
  %v387 = vld [vmem:[%s3 + $0x14] sm:$0xf]
  %v388 = vld [vmem:[%s3 + $0x18] sm:$0xf]
  %v389 = vld [vmem:[%s3 + $0x1c] sm:$0xf]
  %v390 = vld [vmem:[%s3 + $0x20] sm:$0xf]
  %v391 = vld [vmem:[%s3 + $0x24] sm:$0xf]
  %v392 = vld [vmem:[%s3 + $0x28] sm:$0xf]
  %v393 = vld [vmem:[%s3 + $0x2c] sm:$0xf]
  %v394 = vld [vmem:[%s3 + $0x30] sm:$0xf]
  %v395 = vld [vmem:[%s3 + $0x34] sm:$0xf]
  %v396 = vld [vmem:[%s3 + $0x38] sm:$0xf]
  %v397 = vld [vmem:[%s3 + $0x3c] sm:$0xf]
  %v398 = vld [vmem:[%s4] sm:$0x1]
  %v400 = vlaneseq
  %v401 = vshrl.u32 %v400, 7
  %v402 = vsub.s32 0, %v401
  %v403 = vrot.slane %v398, %v402
  %v421 = vunpack.c.l.b16 %v382
  %v422 = vunpack.c.l.b16 %v383
  %v423 = vunpack.c.l.b16 %v384
  %v424 = vunpack.c.l.b16 %v385
  %v425 = vunpack.c.l.b16 %v386
  %v426 = vunpack.c.l.b16 %v387
  %v427 = vunpack.c.l.b16 %v388
  %v428 = vunpack.c.l.b16 %v389
  %v429 = vunpack.c.l.b16 %v390
  %v430 = vunpack.c.l.b16 %v391
  %v431 = vunpack.c.l.b16 %v392
  %v432 = vunpack.c.l.b16 %v393
  %v433 = vunpack.c.l.b16 %v394
  %v434 = vunpack.c.l.b16 %v395
  %v435 = vunpack.c.l.b16 %v396
  %v436 = vunpack.c.l.b16 %v397
  %v437 = vpack.c.b16 %v422, %v421
  %v438 = vpack.c.b16 %v424, %v423
  %v439 = vpack.c.b16 %v426, %v425
  %v440 = vpack.c.b16 %v428, %v427
  %v441 = vpack.c.b16 %v430, %v429
  %v442 = vpack.c.b16 %v432, %v431
  %v443 = vpack.c.b16 %v434, %v433
  %v444 = vpack.c.b16 %v436, %v435
  %453 = vmatprep.subr.bf16.mxu0 0
  %454 = vmatpush1.bf16.msra.mxu0 %v437
  %455 = vmatprep.subr.bf16.mxu0 0
  %456 = vmatpush1.bf16.msra.mxu0 %v438
  %457 = vmatprep.subr.bf16.mxu0 0
  %458 = vmatpush1.bf16.msra.mxu0 %v439
  %459 = vmatprep.subr.bf16.mxu0 0
  %460 = vmatpush1.bf16.msra.mxu0 %v440
  %461 = vmatprep.subr.bf16.mxu0 0
  %462 = vmatpush1.bf16.msra.mxu0 %v441
  %463 = vmatprep.subr.bf16.mxu0 0
  %464 = vmatpush1.bf16.msra.mxu0 %v442
  %465 = vmatprep.subr.bf16.mxu0 0
  %466 = vmatpush1.bf16.msra.mxu0 %v443
  %467 = vmatprep.subr.bf16.mxu0 0
  %468 = vmatpush1.bf16.msra.mxu0 %v444
  %469 = vmatprep.subr.bf16.mxu0 0
  %470 = vmatpush1.bf16.msra.mxu0 0
  %471 = vmatprep.subr.bf16.mxu0 0
  %472 = vmatpush1.bf16.msra.mxu0 0
  %473 = vmatprep.subr.bf16.mxu0 0
  %474 = vmatpush1.bf16.msra.mxu0 0
  %475 = vmatprep.subr.bf16.mxu0 0
  %476 = vmatpush1.bf16.msra.mxu0 0
  %477 = vmatprep.subr.bf16.mxu0 0
  %478 = vmatpush1.bf16.msra.mxu0 0
  %479 = vmatprep.subr.bf16.mxu0 0
  %480 = vmatpush1.bf16.msra.mxu0 0
  %481 = vmatprep.subr.bf16.mxu0 0
  %482 = vmatpush1.bf16.msra.mxu0 0
  %483 = vmatprep.subr.bf16.mxu0 0
  %484 = vmatpush1.bf16.msra.mxu0 0
  %485 = vmatprep.mubr.bf16.mxu0 0
  %486 = vmatmul.mubr.bf16.gmra.mrb[0].mxu0 %v381
  %v487 = vpop.f32.mrb[0].mxu0
  %v488 = vadd.f32 %v403, %v487
  %v489 = vpop.f32.mrb[0].mxu0
  %v490 = vpop.f32.mrb[0].mxu0
  %v491 = vpop.f32.mrb[0].mxu0
  %492 = vdwg.mxu0
  %v493 = vmax.f32 %v488, 0.0
  %494 = vst [vmem:[%s5] sm:$0xff] %v493
  // Predicated region
  $region22: #{classify_net_forward.5} parent=0 // pred_check
    _
  $region23: #{classify_net_forward.5} parent=0 // pred_check_branch
    %496 = sbr.rel (0) target = $region25
  $region24: #{classify_net_forward.5} parent=0 // pred_region
    _
  $region25: #{classify_net_forward.5} parent=0 // pred_fallthru
    _
  // Predicated region
  $region26: #{classify_net_forward.5} parent=0 // pred_check
    _
  $region27: #{classify_net_forward.5} parent=0 // pred_check_branch
    %498 = sbr.rel (0) target = $region29
  $region28: #{classify_net_forward.5} parent=0 // pred_region
    _
  $region29: #{classify_net_forward.5} parent=0 // pred_fallthru
    _

// kernel: classify_net_forward.4
$region0: #{classify_net_forward.4}
  #allocation0 [shape = 'u32[]', space=smem, size = 0x4, offset = 0x4, fixed_abs, tag = 'smem constant byte address 0x4 - core index']
  #allocation1 [shape = 'u32[144,128]{1,0:T(1,128)}', space=vmem, size = 0x12000, scoped, tag = 'internal scratch']
  %s0 = inlined_call_operand.vmem [shape: bf16[4,16,512], index: 0, kind: input, shape index: {}]
  %s1 = inlined_call_operand.vmem [shape: bf16[512,128], index: 1, kind: input, shape index: {}]
  %s2 = inlined_call_operand.vmem [shape: f32[1,128], index: 2, kind: input, shape index: {}]
  %s3 = inlined_call_operand.vmem [shape: bf16[16,128], index: 3, kind: output, shape index: {}]
  %s4 = sld [smem:[#allocation0]]
  $region22: #{classify_net_forward.4} parent=0
    _
  %s6 = ssub.s32 1, %s4
  %s7 = scalar_select 0, %s6, %s4
  // Predicated region
  $region2: #{classify_net_forward.4} parent=0 // pred_check
    _
  $region3: #{classify_net_forward.4} parent=0 // pred_check_branch
    %9 = sbr.rel (0) target = $region5
  $region4: #{classify_net_forward.4} parent=0 // pred_region
    _
  $region5: #{classify_net_forward.4} parent=0 // pred_fallthru
    _
  // Predicated region
  $region6: #{classify_net_forward.4} parent=0 // pred_check
    _
  $region7: #{classify_net_forward.4} parent=0 // pred_check_branch
    %11 = sbr.rel (0) target = $region9
  $region8: #{classify_net_forward.4} parent=0 // pred_region
    _
  $region9: #{classify_net_forward.4} parent=0 // pred_fallthru
    _
  // Predicated region
  $region10: #{classify_net_forward.4} parent=0 // pred_check
    _
  $region11: #{classify_net_forward.4} parent=0 // pred_check_branch
    %13 = sbr.rel (0) target = $region13
  $region12: #{classify_net_forward.4} parent=0 // pred_region
    _
  $region13: #{classify_net_forward.4} parent=0 // pred_fallthru
    _
  %v15 = vld [vmem:[%s1] sm:$0xf]
  %v16 = vld [vmem:[%s1 + $0x4] sm:$0xf]
  %v17 = vld [vmem:[%s1 + $0x8] sm:$0xf]
  %v18 = vld [vmem:[%s1 + $0xc] sm:$0xf]
  %v19 = vld [vmem:[%s1 + $0x10] sm:$0xf]
  %v20 = vld [vmem:[%s1 + $0x14] sm:$0xf]
  %v21 = vld [vmem:[%s1 + $0x18] sm:$0xf]
  %v22 = vld [vmem:[%s1 + $0x1c] sm:$0xf]
  %v23 = vld [vmem:[%s1 + $0x20] sm:$0xf]
  %v24 = vld [vmem:[%s1 + $0x24] sm:$0xf]
  %v25 = vld [vmem:[%s1 + $0x28] sm:$0xf]
  %v26 = vld [vmem:[%s1 + $0x2c] sm:$0xf]
  %v27 = vld [vmem:[%s1 + $0x30] sm:$0xf]
  %v28 = vld [vmem:[%s1 + $0x34] sm:$0xf]
  %v29 = vld [vmem:[%s1 + $0x38] sm:$0xf]
  %v30 = vld [vmem:[%s1 + $0x3c] sm:$0xf]
  %v31 = vld [vmem:[%s1 + $0x40] sm:$0xf]
  %v32 = vld [vmem:[%s1 + $0x44] sm:$0xf]
  %v33 = vld [vmem:[%s1 + $0x48] sm:$0xf]
  %v34 = vld [vmem:[%s1 + $0x4c] sm:$0xf]
  %v35 = vld [vmem:[%s1 + $0x50] sm:$0xf]
  %v36 = vld [vmem:[%s1 + $0x54] sm:$0xf]
  %v37 = vld [vmem:[%s1 + $0x58] sm:$0xf]
  %v38 = vld [vmem:[%s1 + $0x5c] sm:$0xf]
  %v39 = vld [vmem:[%s1 + $0x60] sm:$0xf]
  %v40 = vld [vmem:[%s1 + $0x64] sm:$0xf]
  %v41 = vld [vmem:[%s1 + $0x68] sm:$0xf]
  %v42 = vld [vmem:[%s1 + $0x6c] sm:$0xf]
  %v43 = vld [vmem:[%s1 + $0x70] sm:$0xf]
  %v44 = vld [vmem:[%s1 + $0x74] sm:$0xf]
  %v45 = vld [vmem:[%s1 + $0x78] sm:$0xf]
  %v46 = vld [vmem:[%s1 + $0x7c] sm:$0xf]
  %v47 = vld [vmem:[%s1 + $0x80] sm:$0xf]
  %v48 = vld [vmem:[%s1 + $0x84] sm:$0xf]
  %v49 = vld [vmem:[%s1 + $0x88] sm:$0xf]
  %v50 = vld [vmem:[%s1 + $0x8c] sm:$0xf]
  %v51 = vld [vmem:[%s1 + $0x90] sm:$0xf]
  %v52 = vld [vmem:[%s1 + $0x94] sm:$0xf]
  %v53 = vld [vmem:[%s1 + $0x98] sm:$0xf]
  %v54 = vld [vmem:[%s1 + $0x9c] sm:$0xf]
  %v55 = vld [vmem:[%s1 + $0xa0] sm:$0xf]
  %v56 = vld [vmem:[%s1 + $0xa4] sm:$0xf]
  %v57 = vld [vmem:[%s1 + $0xa8] sm:$0xf]
  %v58 = vld [vmem:[%s1 + $0xac] sm:$0xf]
  %v59 = vld [vmem:[%s1 + $0xb0] sm:$0xf]
  %v60 = vld [vmem:[%s1 + $0xb4] sm:$0xf]
  %v61 = vld [vmem:[%s1 + $0xb8] sm:$0xf]
  %v62 = vld [vmem:[%s1 + $0xbc] sm:$0xf]
  %v63 = vld [vmem:[%s1 + $0xc0] sm:$0xf]
  %v64 = vld [vmem:[%s1 + $0xc4] sm:$0xf]
  %v65 = vld [vmem:[%s1 + $0xc8] sm:$0xf]
  %v66 = vld [vmem:[%s1 + $0xcc] sm:$0xf]
  %v67 = vld [vmem:[%s1 + $0xd0] sm:$0xf]
  %v68 = vld [vmem:[%s1 + $0xd4] sm:$0xf]
  %v69 = vld [vmem:[%s1 + $0xd8] sm:$0xf]
  %v70 = vld [vmem:[%s1 + $0xdc] sm:$0xf]
  %v71 = vld [vmem:[%s1 + $0xe0] sm:$0xf]
  %v72 = vld [vmem:[%s1 + $0xe4] sm:$0xf]
  %v73 = vld [vmem:[%s1 + $0xe8] sm:$0xf]
  %v74 = vld [vmem:[%s1 + $0xec] sm:$0xf]
  %v75 = vld [vmem:[%s1 + $0xf0] sm:$0xf]
  %v76 = vld [vmem:[%s1 + $0xf4] sm:$0xf]
  %v77 = vld [vmem:[%s1 + $0xf8] sm:$0xf]
  %v78 = vld [vmem:[%s1 + $0xfc] sm:$0xf]
  %v79 = vld [vmem:[%s0] sm:$0xff]
  %v80 = vld [vmem:[%s0 + $0x8] sm:$0xff]
  %v81 = vld [vmem:[%s0 + $0x10] sm:$0xff]
  %v82 = vld [vmem:[%s0 + $0x18] sm:$0xff]
  %v87 = vunpack.c.l.b16 %v79
  %v88 = vunpack.c.h.b16 %v79
  %v89 = vunpack.c.l.b16 %v80
  %v90 = vunpack.c.h.b16 %v80
  %v91 = vunpack.c.l.b16 %v81
  %v92 = vunpack.c.h.b16 %v81
  %v93 = vunpack.c.l.b16 %v82
  %v94 = vunpack.c.h.b16 %v82
  %v95 = vpack.c.b16 %v91, %v87
  %v96 = vpack.c.b16 %v92, %v88
  %v97 = vpack.c.b16 %v93, %v89
  %v98 = vpack.c.b16 %v94, %v90
  %v167 = vunpack.c.l.b16 %v15
  %v168 = vunpack.c.l.b16 %v16
  %v169 = vunpack.c.l.b16 %v17
  %v170 = vunpack.c.l.b16 %v18
  %v171 = vunpack.c.l.b16 %v19
  %v172 = vunpack.c.l.b16 %v20
  %v173 = vunpack.c.l.b16 %v21
  %v174 = vunpack.c.l.b16 %v22
  %v175 = vunpack.c.l.b16 %v23
  %v176 = vunpack.c.l.b16 %v24
  %v177 = vunpack.c.l.b16 %v25
  %v178 = vunpack.c.l.b16 %v26
  %v179 = vunpack.c.l.b16 %v27
  %v180 = vunpack.c.l.b16 %v28
  %v181 = vunpack.c.l.b16 %v29
  %v182 = vunpack.c.l.b16 %v30
  %v183 = vunpack.c.l.b16 %v31
  %v184 = vunpack.c.l.b16 %v32
  %v185 = vunpack.c.l.b16 %v33
  %v186 = vunpack.c.l.b16 %v34
  %v187 = vunpack.c.l.b16 %v35
  %v188 = vunpack.c.l.b16 %v36
  %v189 = vunpack.c.l.b16 %v37
  %v190 = vunpack.c.l.b16 %v38
  %v191 = vunpack.c.l.b16 %v39
  %v192 = vunpack.c.l.b16 %v40
  %v193 = vunpack.c.l.b16 %v41
  %v194 = vunpack.c.l.b16 %v42
  %v195 = vunpack.c.l.b16 %v43
  %v196 = vunpack.c.l.b16 %v44
  %v197 = vunpack.c.l.b16 %v45
  %v198 = vunpack.c.l.b16 %v46
  %v199 = vunpack.c.l.b16 %v47
  %v200 = vunpack.c.l.b16 %v48
  %v201 = vunpack.c.l.b16 %v49
  %v202 = vunpack.c.l.b16 %v50
  %v203 = vunpack.c.l.b16 %v51
  %v204 = vunpack.c.l.b16 %v52
  %v205 = vunpack.c.l.b16 %v53
  %v206 = vunpack.c.l.b16 %v54
  %v207 = vunpack.c.l.b16 %v55
  %v208 = vunpack.c.l.b16 %v56
  %v209 = vunpack.c.l.b16 %v57
  %v210 = vunpack.c.l.b16 %v58
  %v211 = vunpack.c.l.b16 %v59
  %v212 = vunpack.c.l.b16 %v60
  %v213 = vunpack.c.l.b16 %v61
  %v214 = vunpack.c.l.b16 %v62
  %v215 = vunpack.c.l.b16 %v63
  %v216 = vunpack.c.l.b16 %v64
  %v217 = vunpack.c.l.b16 %v65
  %v218 = vunpack.c.l.b16 %v66
  %v219 = vunpack.c.l.b16 %v67
  %v220 = vunpack.c.l.b16 %v68
  %v221 = vunpack.c.l.b16 %v69
  %v222 = vunpack.c.l.b16 %v70
  %v223 = vunpack.c.l.b16 %v71
  %v224 = vunpack.c.l.b16 %v72
  %v225 = vunpack.c.l.b16 %v73
  %v226 = vunpack.c.l.b16 %v74
  %v227 = vunpack.c.l.b16 %v75
  %v228 = vunpack.c.l.b16 %v76
  %v229 = vunpack.c.l.b16 %v77
  %v230 = vunpack.c.l.b16 %v78
  %v231 = vpack.c.b16 %v168, %v167
  %v232 = vpack.c.b16 %v170, %v169
  %v233 = vpack.c.b16 %v172, %v171
  %v234 = vpack.c.b16 %v174, %v173
  %v235 = vpack.c.b16 %v176, %v175
  %v236 = vpack.c.b16 %v178, %v177
  %v237 = vpack.c.b16 %v180, %v179
  %v238 = vpack.c.b16 %v182, %v181
  %v239 = vpack.c.b16 %v184, %v183
  %v240 = vpack.c.b16 %v186, %v185
  %v241 = vpack.c.b16 %v188, %v187
  %v242 = vpack.c.b16 %v190, %v189
  %v243 = vpack.c.b16 %v192, %v191
  %v244 = vpack.c.b16 %v194, %v193
  %v245 = vpack.c.b16 %v196, %v195
  %v246 = vpack.c.b16 %v198, %v197
  %v247 = vpack.c.b16 %v200, %v199
  %v248 = vpack.c.b16 %v202, %v201
  %v249 = vpack.c.b16 %v204, %v203
  %v250 = vpack.c.b16 %v206, %v205
  %v251 = vpack.c.b16 %v208, %v207
  %v252 = vpack.c.b16 %v210, %v209
  %v253 = vpack.c.b16 %v212, %v211
  %v254 = vpack.c.b16 %v214, %v213
  %v255 = vpack.c.b16 %v216, %v215
  %v256 = vpack.c.b16 %v218, %v217
  %v257 = vpack.c.b16 %v220, %v219
  %v258 = vpack.c.b16 %v222, %v221
  %v259 = vpack.c.b16 %v224, %v223
  %v260 = vpack.c.b16 %v226, %v225
  %v261 = vpack.c.b16 %v228, %v227
  %v262 = vpack.c.b16 %v230, %v229
  %295 = vmatprep.subr.bf16.mxu0 0
  %296 = vmatpush1.bf16.msra.mxu0 %v231
  %297 = vmatprep.subr.bf16.mxu0 0
  %298 = vmatpush1.bf16.msra.mxu0 %v232
  %299 = vmatprep.subr.bf16.mxu0 0
  %300 = vmatpush1.bf16.msra.mxu0 %v233
  %301 = vmatprep.subr.bf16.mxu0 0
  %302 = vmatpush1.bf16.msra.mxu0 %v234
  %303 = vmatprep.subr.bf16.mxu0 0
  %304 = vmatpush1.bf16.msra.mxu0 %v235
  %305 = vmatprep.subr.bf16.mxu0 0
  %306 = vmatpush1.bf16.msra.mxu0 %v236
  %307 = vmatprep.subr.bf16.mxu0 0
  %308 = vmatpush1.bf16.msra.mxu0 %v237
  %309 = vmatprep.subr.bf16.mxu0 0
  %310 = vmatpush1.bf16.msra.mxu0 %v238
  %311 = vmatprep.subr.bf16.mxu0 0
  %312 = vmatpush1.bf16.msra.mxu0 %v239
  %313 = vmatprep.subr.bf16.mxu0 0
  %314 = vmatpush1.bf16.msra.mxu0 %v240
  %315 = vmatprep.subr.bf16.mxu0 0
  %316 = vmatpush1.bf16.msra.mxu0 %v241
  %317 = vmatprep.subr.bf16.mxu0 0
  %318 = vmatpush1.bf16.msra.mxu0 %v242
  %319 = vmatprep.subr.bf16.mxu0 0
  %320 = vmatpush1.bf16.msra.mxu0 %v243
  %321 = vmatprep.subr.bf16.mxu0 0
  %322 = vmatpush1.bf16.msra.mxu0 %v244
  %323 = vmatprep.subr.bf16.mxu0 0
  %324 = vmatpush1.bf16.msra.mxu0 %v245
  %325 = vmatprep.subr.bf16.mxu0 0
  %326 = vmatpush1.bf16.msra.mxu0 %v246
  %327 = vmatprep.mubr.bf16.mxu0 %v96
  %328 = vmatmul.mubr.bf16.gmra.mrb[0].mxu0 %v95
  %v329 = vpop.f32.mrb[0].mxu0
  %v330 = vadd.f32 0.0, %v329
  %v331 = vpop.f32.mrb[0].mxu0
  %v332 = vpop.f32.mrb[0].mxu0
  %v333 = vadd.f32 0.0, %v332
  %v334 = vpop.f32.mrb[0].mxu0
  %335 = vdwg.mxu0
  %336 = vmatprep.subr.bf16.mxu0 0
  %337 = vmatpush1.bf16.msra.mxu0 %v247
  %338 = vmatprep.subr.bf16.mxu0 0
  %339 = vmatpush1.bf16.msra.mxu0 %v248
  %340 = vmatprep.subr.bf16.mxu0 0
  %341 = vmatpush1.bf16.msra.mxu0 %v249
  %342 = vmatprep.subr.bf16.mxu0 0
  %343 = vmatpush1.bf16.msra.mxu0 %v250
  %344 = vmatprep.subr.bf16.mxu0 0
  %345 = vmatpush1.bf16.msra.mxu0 %v251
  %346 = vmatprep.subr.bf16.mxu0 0
  %347 = vmatpush1.bf16.msra.mxu0 %v252
  %348 = vmatprep.subr.bf16.mxu0 0
  %349 = vmatpush1.bf16.msra.mxu0 %v253
  %350 = vmatprep.subr.bf16.mxu0 0
  %351 = vmatpush1.bf16.msra.mxu0 %v254
  %352 = vmatprep.subr.bf16.mxu0 0
  %353 = vmatpush1.bf16.msra.mxu0 %v255
  %354 = vmatprep.subr.bf16.mxu0 0
  %355 = vmatpush1.bf16.msra.mxu0 %v256
  %356 = vmatprep.subr.bf16.mxu0 0
  %357 = vmatpush1.bf16.msra.mxu0 %v257
  %358 = vmatprep.subr.bf16.mxu0 0
  %359 = vmatpush1.bf16.msra.mxu0 %v258
  %360 = vmatprep.subr.bf16.mxu0 0
  %361 = vmatpush1.bf16.msra.mxu0 %v259
  %362 = vmatprep.subr.bf16.mxu0 0
  %363 = vmatpush1.bf16.msra.mxu0 %v260
  %364 = vmatprep.subr.bf16.mxu0 0
  %365 = vmatpush1.bf16.msra.mxu0 %v261
  %366 = vmatprep.subr.bf16.mxu0 0
  %367 = vmatpush1.bf16.msra.mxu0 %v262
  %368 = vmatprep.mubr.bf16.mxu0 %v98
  %369 = vmatmul.mubr.bf16.gmra.mrb[0].mxu0 %v97
  %v370 = vpop.f32.mrb[0].mxu0
  %v371 = vadd.f32 %v330, %v370
  %v372 = vpop.f32.mrb[0].mxu0
  %v373 = vpop.f32.mrb[0].mxu0
  %v374 = vadd.f32 %v333, %v373
  %v375 = vpop.f32.mrb[0].mxu0
  %376 = vdwg.mxu0
  %s377 = scalar_lea.vmem %s0, 32
  %v378 = vld [vmem:[%s377] sm:$0xff]
  %v379 = vld [vmem:[%s377 + $0x8] sm:$0xff]
  %v380 = vld [vmem:[%s377 + $0x10] sm:$0xff]
  %v381 = vld [vmem:[%s377 + $0x18] sm:$0xff]
  %v386 = vunpack.c.l.b16 %v378
  %v387 = vunpack.c.h.b16 %v378
  %v388 = vunpack.c.l.b16 %v379
  %v389 = vunpack.c.h.b16 %v379
  %v390 = vunpack.c.l.b16 %v380
  %v391 = vunpack.c.h.b16 %v380
  %v392 = vunpack.c.l.b16 %v381
  %v393 = vunpack.c.h.b16 %v381
  %v394 = vpack.c.b16 %v390, %v386
  %v395 = vpack.c.b16 %v391, %v387
  %v396 = vpack.c.b16 %v392, %v388
  %v397 = vpack.c.b16 %v393, %v389
  %402 = vmatprep.subr.bf16.mxu0 0
  %403 = vmatpush1.bf16.msra.mxu0 %v231
  %404 = vmatprep.subr.bf16.mxu0 0
  %405 = vmatpush1.bf16.msra.mxu0 %v232
  %406 = vmatprep.subr.bf16.mxu0 0
  %407 = vmatpush1.bf16.msra.mxu0 %v233
  %408 = vmatprep.subr.bf16.mxu0 0
  %409 = vmatpush1.bf16.msra.mxu0 %v234
  %410 = vmatprep.subr.bf16.mxu0 0
  %411 = vmatpush1.bf16.msra.mxu0 %v235
  %412 = vmatprep.subr.bf16.mxu0 0
  %413 = vmatpush1.bf16.msra.mxu0 %v236
  %414 = vmatprep.subr.bf16.mxu0 0
  %415 = vmatpush1.bf16.msra.mxu0 %v237
  %416 = vmatprep.subr.bf16.mxu0 0
  %417 = vmatpush1.bf16.msra.mxu0 %v238
  %418 = vmatprep.subr.bf16.mxu0 0
  %419 = vmatpush1.bf16.msra.mxu0 %v239
  %420 = vmatprep.subr.bf16.mxu0 0
  %421 = vmatpush1.bf16.msra.mxu0 %v240
  %422 = vmatprep.subr.bf16.mxu0 0
  %423 = vmatpush1.bf16.msra.mxu0 %v241
  %424 = vmatprep.subr.bf16.mxu0 0
  %425 = vmatpush1.bf16.msra.mxu0 %v242
  %426 = vmatprep.subr.bf16.mxu0 0
  %427 = vmatpush1.bf16.msra.mxu0 %v243
  %428 = vmatprep.subr.bf16.mxu0 0
  %429 = vmatpush1.bf16.msra.mxu0 %v244
  %430 = vmatprep.subr.bf16.mxu0 0
  %431 = vmatpush1.bf16.msra.mxu0 %v245
  %432 = vmatprep.subr.bf16.mxu0 0
  %433 = vmatpush1.bf16.msra.mxu0 %v246
  %434 = vmatprep.mubr.bf16.mxu0 %v395
  %435 = vmatmul.mubr.bf16.gmra.mrb[0].mxu0 %v394
  %v436 = vpop.f32.mrb[0].mxu0
  %v437 = vadd.f32 0.0, %v436
  %v438 = vpop.f32.mrb[0].mxu0
  %v439 = vpop.f32.mrb[0].mxu0
  %v440 = vadd.f32 0.0, %v439
  %v441 = vpop.f32.mrb[0].mxu0
  %442 = vdwg.mxu0
  %443 = vmatprep.subr.bf16.mxu0 0
  %444 = vmatpush1.bf16.msra.mxu0 %v247
  %445 = vmatprep.subr.bf16.mxu0 0
  %446 = vmatpush1.bf16.msra.mxu0 %v248
  %447 = vmatprep.subr.bf16.mxu0 0
  %448 = vmatpush1.bf16.msra.mxu0 %v249
  %449 = vmatprep.subr.bf16.mxu0 0
  %450 = vmatpush1.bf16.msra.mxu0 %v250
  %451 = vmatprep.subr.bf16.mxu0 0
  %452 = vmatpush1.bf16.msra.mxu0 %v251
  %453 = vmatprep.subr.bf16.mxu0 0
  %454 = vmatpush1.bf16.msra.mxu0 %v252
  %455 = vmatprep.subr.bf16.mxu0 0
  %456 = vmatpush1.bf16.msra.mxu0 %v253
  %457 = vmatprep.subr.bf16.mxu0 0
  %458 = vmatpush1.bf16.msra.mxu0 %v254
  %459 = vmatprep.subr.bf16.mxu0 0
  %460 = vmatpush1.bf16.msra.mxu0 %v255
  %461 = vmatprep.subr.bf16.mxu0 0
  %462 = vmatpush1.bf16.msra.mxu0 %v256
  %463 = vmatprep.subr.bf16.mxu0 0
  %464 = vmatpush1.bf16.msra.mxu0 %v257
  %465 = vmatprep.subr.bf16.mxu0 0
  %466 = vmatpush1.bf16.msra.mxu0 %v258
  %467 = vmatprep.subr.bf16.mxu0 0
  %468 = vmatpush1.bf16.msra.mxu0 %v259
  %469 = vmatprep.subr.bf16.mxu0 0
  %470 = vmatpush1.bf16.msra.mxu0 %v260
  %471 = vmatprep.subr.bf16.mxu0 0
  %472 = vmatpush1.bf16.msra.mxu0 %v261
  %473 = vmatprep.subr.bf16.mxu0 0
  %474 = vmatpush1.bf16.msra.mxu0 %v262
  %475 = vmatprep.mubr.bf16.mxu0 %v397
  %476 = vmatmul.mubr.bf16.gmra.mrb[0].mxu0 %v396
  %v477 = vpop.f32.mrb[0].mxu0
  %v478 = vadd.f32 %v437, %v477
  %v479 = vpop.f32.mrb[0].mxu0
  %v480 = vpop.f32.mrb[0].mxu0
  %v481 = vadd.f32 %v440, %v480
  %v482 = vpop.f32.mrb[0].mxu0
  %483 = vdwg.mxu0
  %v484 = vmax.f32 %v371, %v478
  %v485 = vmax.f32 %v374, %v481
  %s486 = scalar_lea.vmem %s0, 64
  %v487 = vld [vmem:[%s486] sm:$0xff]
  %v488 = vld [vmem:[%s486 + $0x8] sm:$0xff]
  %v489 = vld [vmem:[%s486 + $0x10] sm:$0xff]
  %v490 = vld [vmem:[%s486 + $0x18] sm:$0xff]
  %v495 = vunpack.c.l.b16 %v487
  %v496 = vunpack.c.h.b16 %v487
  %v497 = vunpack.c.l.b16 %v488
  %v498 = vunpack.c.h.b16 %v488
  %v499 = vunpack.c.l.b16 %v489
  %v500 = vunpack.c.h.b16 %v489
  %v501 = vunpack.c.l.b16 %v490
  %v502 = vunpack.c.h.b16 %v490
  %v503 = vpack.c.b16 %v499, %v495
  %v504 = vpack.c.b16 %v500, %v496
  %v505 = vpack.c.b16 %v501, %v497
  %v506 = vpack.c.b16 %v502, %v498
  %511 = vmatprep.subr.bf16.mxu0 0
  %512 = vmatpush1.bf16.msra.mxu0 %v231
  %513 = vmatprep.subr.bf16.mxu0 0
  %514 = vmatpush1.bf16.msra.mxu0 %v232
  %515 = vmatprep.subr.bf16.mxu0 0
  %516 = vmatpush1.bf16.msra.mxu0 %v233
  %517 = vmatprep.subr.bf16.mxu0 0
  %518 = vmatpush1.bf16.msra.mxu0 %v234
  %519 = vmatprep.subr.bf16.mxu0 0
  %520 = vmatpush1.bf16.msra.mxu0 %v235
  %521 = vmatprep.subr.bf16.mxu0 0
  %522 = vmatpush1.bf16.msra.mxu0 %v236
  %523 = vmatprep.subr.bf16.mxu0 0
  %524 = vmatpush1.bf16.msra.mxu0 %v237
  %525 = vmatprep.subr.bf16.mxu0 0
  %526 = vmatpush1.bf16.msra.mxu0 %v238
  %527 = vmatprep.subr.bf16.mxu0 0
  %528 = vmatpush1.bf16.msra.mxu0 %v239
  %529 = vmatprep.subr.bf16.mxu0 0
  %530 = vmatpush1.bf16.msra.mxu0 %v240
  %531 = vmatprep.subr.bf16.mxu0 0
  %532 = vmatpush1.bf16.msra.mxu0 %v241
  %533 = vmatprep.subr.bf16.mxu0 0
  %534 = vmatpush1.bf16.msra.mxu0 %v242
  %535 = vmatprep.subr.bf16.mxu0 0
  %536 = vmatpush1.bf16.msra.mxu0 %v243
  %537 = vmatprep.subr.bf16.mxu0 0
  %538 = vmatpush1.bf16.msra.mxu0 %v244
  %539 = vmatprep.subr.bf16.mxu0 0
  %540 = vmatpush1.bf16.msra.mxu0 %v245
  %541 = vmatprep.subr.bf16.mxu0 0
  %542 = vmatpush1.bf16.msra.mxu0 %v246
  %543 = vmatprep.mubr.bf16.mxu0 %v504
  %544 = vmatmul.mubr.bf16.gmra.mrb[0].mxu0 %v503
  %v545 = vpop.f32.mrb[0].mxu0
  %v546 = vadd.f32 0.0, %v545
  %v547 = vpop.f32.mrb[0].mxu0
  %v548 = vpop.f32.mrb[0].mxu0
  %v549 = vadd.f32 0.0, %v548
  %v550 = vpop.f32.mrb[0].mxu0
  %551 = vdwg.mxu0
  %552 = vmatprep.subr.bf16.mxu0 0
  %553 = vmatpush1.bf16.msra.mxu0 %v247
  %554 = vmatprep.subr.bf16.mxu0 0
  %555 = vmatpush1.bf16.msra.mxu0 %v248
  %556 = vmatprep.subr.bf16.mxu0 0
  %557 = vmatpush1.bf16.msra.mxu0 %v249
  %558 = vmatprep.subr.bf16.mxu0 0
  %559 = vmatpush1.bf16.msra.mxu0 %v250
  %560 = vmatprep.subr.bf16.mxu0 0
  %561 = vmatpush1.bf16.msra.mxu0 %v251
  %562 = vmatprep.subr.bf16.mxu0 0
  %563 = vmatpush1.bf16.msra.mxu0 %v252
  %564 = vmatprep.subr.bf16.mxu0 0
  %565 = vmatpush1.bf16.msra.mxu0 %v253
  %566 = vmatprep.subr.bf16.mxu0 0
  %567 = vmatpush1.bf16.msra.mxu0 %v254
  %568 = vmatprep.subr.bf16.mxu0 0
  %569 = vmatpush1.bf16.msra.mxu0 %v255
  %570 = vmatprep.subr.bf16.mxu0 0
  %571 = vmatpush1.bf16.msra.mxu0 %v256
  %572 = vmatprep.subr.bf16.mxu0 0
  %573 = vmatpush1.bf16.msra.mxu0 %v257
  %574 = vmatprep.subr.bf16.mxu0 0
  %575 = vmatpush1.bf16.msra.mxu0 %v258
  %576 = vmatprep.subr.bf16.mxu0 0
  %577 = vmatpush1.bf16.msra.mxu0 %v259
  %578 = vmatprep.subr.bf16.mxu0 0
  %579 = vmatpush1.bf16.msra.mxu0 %v260
  %580 = vmatprep.subr.bf16.mxu0 0
  %581 = vmatpush1.bf16.msra.mxu0 %v261
  %582 = vmatprep.subr.bf16.mxu0 0
  %583 = vmatpush1.bf16.msra.mxu0 %v262
  %584 = vmatprep.mubr.bf16.mxu0 %v506
  %585 = vmatmul.mubr.bf16.gmra.mrb[0].mxu0 %v505
  %v586 = vpop.f32.mrb[0].mxu0
  %v587 = vadd.f32 %v546, %v586
  %v588 = vpop.f32.mrb[0].mxu0
  %v589 = vpop.f32.mrb[0].mxu0
  %v590 = vadd.f32 %v549, %v589
  %v591 = vpop.f32.mrb[0].mxu0
  %592 = vdwg.mxu0
  %v593 = vmax.f32 %v484, %v587
  %v594 = vmax.f32 %v485, %v590
  %s595 = scalar_lea.vmem %s0, 96
  %v596 = vld [vmem:[%s595] sm:$0xff]
  %v597 = vld [vmem:[%s595 + $0x8] sm:$0xff]
  %v598 = vld [vmem:[%s595 + $0x10] sm:$0xff]
  %v599 = vld [vmem:[%s595 + $0x18] sm:$0xff]
  %v604 = vunpack.c.l.b16 %v596
  %v605 = vunpack.c.h.b16 %v596
  %v606 = vunpack.c.l.b16 %v597
  %v607 = vunpack.c.h.b16 %v597
  %v608 = vunpack.c.l.b16 %v598
  %v609 = vunpack.c.h.b16 %v598
  %v610 = vunpack.c.l.b16 %v599
  %v611 = vunpack.c.h.b16 %v599
  %v612 = vpack.c.b16 %v608, %v604
  %v613 = vpack.c.b16 %v609, %v605
  %v614 = vpack.c.b16 %v610, %v606
  %v615 = vpack.c.b16 %v611, %v607
  %620 = vmatprep.subr.bf16.mxu0 0
  %621 = vmatpush1.bf16.msra.mxu0 %v231
  %622 = vmatprep.subr.bf16.mxu0 0
  %623 = vmatpush1.bf16.msra.mxu0 %v232
  %624 = vmatprep.subr.bf16.mxu0 0
  %625 = vmatpush1.bf16.msra.mxu0 %v233
  %626 = vmatprep.subr.bf16.mxu0 0
  %627 = vmatpush1.bf16.msra.mxu0 %v234
  %628 = vmatprep.subr.bf16.mxu0 0
  %629 = vmatpush1.bf16.msra.mxu0 %v235
  %630 = vmatprep.subr.bf16.mxu0 0
  %631 = vmatpush1.bf16.msra.mxu0 %v236
  %632 = vmatprep.subr.bf16.mxu0 0
  %633 = vmatpush1.bf16.msra.mxu0 %v237
  %634 = vmatprep.subr.bf16.mxu0 0
  %635 = vmatpush1.bf16.msra.mxu0 %v238
  %636 = vmatprep.subr.bf16.mxu0 0
  %637 = vmatpush1.bf16.msra.mxu0 %v239
  %638 = vmatprep.subr.bf16.mxu0 0
  %639 = vmatpush1.bf16.msra.mxu0 %v240
  %640 = vmatprep.subr.bf16.mxu0 0
  %641 = vmatpush1.bf16.msra.mxu0 %v241
  %642 = vmatprep.subr.bf16.mxu0 0
  %643 = vmatpush1.bf16.msra.mxu0 %v242
  %644 = vmatprep.subr.bf16.mxu0 0
  %645 = vmatpush1.bf16.msra.mxu0 %v243
  %646 = vmatprep.subr.bf16.mxu0 0
  %647 = vmatpush1.bf16.msra.mxu0 %v244
  %648 = vmatprep.subr.bf16.mxu0 0
  %649 = vmatpush1.bf16.msra.mxu0 %v245
  %650 = vmatprep.subr.bf16.mxu0 0
  %651 = vmatpush1.bf16.msra.mxu0 %v246
  %652 = vmatprep.mubr.bf16.mxu0 %v613
  %653 = vmatmul.mubr.bf16.gmra.mrb[0].mxu0 %v612
  %v654 = vpop.f32.mrb[0].mxu0
  %v655 = vadd.f32 0.0, %v654
  %v656 = vpop.f32.mrb[0].mxu0
  %v657 = vpop.f32.mrb[0].mxu0
  %v658 = vadd.f32 0.0, %v657
  %v659 = vpop.f32.mrb[0].mxu0
  %660 = vdwg.mxu0
  %661 = vmatprep.subr.bf16.mxu0 0
  %662 = vmatpush1.bf16.msra.mxu0 %v247
  %663 = vmatprep.subr.bf16.mxu0 0
  %664 = vmatpush1.bf16.msra.mxu0 %v248
  %665 = vmatprep.subr.bf16.mxu0 0
  %666 = vmatpush1.bf16.msra.mxu0 %v249
  %667 = vmatprep.subr.bf16.mxu0 0
  %668 = vmatpush1.bf16.msra.mxu0 %v250
  %669 = vmatprep.subr.bf16.mxu0 0
  %670 = vmatpush1.bf16.msra.mxu0 %v251
  %671 = vmatprep.subr.bf16.mxu0 0
  %672 = vmatpush1.bf16.msra.mxu0 %v252
  %673 = vmatprep.subr.bf16.mxu0 0
  %674 = vmatpush1.bf16.msra.mxu0 %v253
  %675 = vmatprep.subr.bf16.mxu0 0
  %676 = vmatpush1.bf16.msra.mxu0 %v254
  %677 = vmatprep.subr.bf16.mxu0 0
  %678 = vmatpush1.bf16.msra.mxu0 %v255
  %679 = vmatprep.subr.bf16.mxu0 0
  %680 = vmatpush1.bf16.msra.mxu0 %v256
  %681 = vmatprep.subr.bf16.mxu0 0
  %682 = vmatpush1.bf16.msra.mxu0 %v257
  %683 = vmatprep.subr.bf16.mxu0 0
  %684 = vmatpush1.bf16.msra.mxu0 %v258
  %685 = vmatprep.subr.bf16.mxu0 0
  %686 = vmatpush1.bf16.msra.mxu0 %v259
  %687 = vmatprep.subr.bf16.mxu0 0
  %688 = vmatpush1.bf16.msra.mxu0 %v260
  %689 = vmatprep.subr.bf16.mxu0 0
  %690 = vmatpush1.bf16.msra.mxu0 %v261
  %691 = vmatprep.subr.bf16.mxu0 0
  %692 = vmatpush1.bf16.msra.mxu0 %v262
  %693 = vmatprep.mubr.bf16.mxu0 %v615
  %694 = vmatmul.mubr.bf16.gmra.mrb[0].mxu0 %v614
  %v695 = vpop.f32.mrb[0].mxu0
  %v696 = vadd.f32 %v655, %v695
  %v697 = vpop.f32.mrb[0].mxu0
  %v698 = vpop.f32.mrb[0].mxu0
  %v699 = vadd.f32 %v658, %v698
  %v700 = vpop.f32.mrb[0].mxu0
  %701 = vdwg.mxu0
  %v702 = vmax.f32 %v593, %v696
  %v703 = vmax.f32 %v594, %v699
  %v704 = vld [vmem:[%s2] sm:$0x1]
  %v706 = vlaneseq
  %v707 = vshrl.u32 %v706, 7
  %v708 = vsub.s32 0, %v707
  %v709 = vrot.slane %v704, %v708
  %v711 = vadd.f32 %v702, %v709
  %v712 = vadd.f32 %v703, %v709
  %v713 = vmax.f32 %v711, 0.0
  %v714 = vmax.f32 %v712, 0.0
  %v715 = vpack.c.bf16 %v714, %v713
  %v717 = vunpack.c.l.b16 %v715
  %v718 = vunpack.c.h.b16 %v715
  %v719 = vpack.c.b16 %v717, %v717
  %v720 = vpack.c.b16 %v718, %v718
  %723 = vst [vmem:[%s3] sm:$0xf] %v719
  %724 = vst [vmem:[%s3 + $0x4] sm:$0xf] %v720
  // Predicated region
  $region14: #{classify_net_forward.4} parent=0 // pred_check
    _
  $region15: #{classify_net_forward.4} parent=0 // pred_check_branch
    %726 = sbr.rel (0) target = $region17
  $region16: #{classify_net_forward.4} parent=0 // pred_region
    _
  $region17: #{classify_net_forward.4} parent=0 // pred_fallthru
    _
  // Predicated region
  $region18: #{classify_net_forward.4} parent=0 // pred_check
    _
  $region19: #{classify_net_forward.4} parent=0 // pred_check_branch
    %728 = sbr.rel (0) target = $region21
  $region20: #{classify_net_forward.4} parent=0 // pred_region
    _
  $region21: #{classify_net_forward.4} parent=0 // pred_fallthru
    _

</llo_original>
